<compile_context>
chip_gen: v5e
topology: v5e:2x2
jax: 0.10.0
libtpu: 0.0.40
codegen_flags: <defaults>
</compile_context>

<pallas_src>
import functools
import math

import jax
import jax.numpy as jnp
from jax import lax
from jax.experimental import pallas as pl
from jax.experimental.pallas import tpu as pltpu


def mha_kernel(x_ref, wq_ref, bq_ref, wk_ref, bk_ref, wv_ref, bv_ref,
               wp_ref, bp_ref, o_ref, *, heads: int):
    """Fused MHA over one (block_b, N, D) batch-block.

    Weights arrive pre-transposed to (in, out) and Wq/bq pre-scaled by
    1/sqrt(hid_channels), so projections are plain x @ W_t + b.
    """
    Bt, N, D = x_ref.shape
    dh = D // heads

    # ---- QKV projections on all Bt*N rows at once (bigger MXU M-dim) ----
    x2 = x_ref[...].reshape(Bt * N, D).astype(jnp.float32)
    q = jnp.dot(x2, wq_ref[...], preferred_element_type=jnp.float32) + bq_ref[...]
    k = jnp.dot(x2, wk_ref[...], preferred_element_type=jnp.float32) + bk_ref[...]
    v = jnp.dot(x2, wv_ref[...], preferred_element_type=jnp.float32) + bv_ref[...]
    q = q.reshape(Bt, N, D)
    k = k.reshape(Bt, N, D)
    v = v.reshape(Bt, N, D)

    # q @ k^T without materializing k.T: contract last dim of both operands.
    dn_qkT = (((1,), (1,)), ((), ()))

    bp = bp_ref[...].astype(jnp.float32)                     # (1, D)

    for b in range(Bt):                                      # static, small
        qb, kb, vb = q[b], k[b], v[b]                        # (N, D)
        out_acc = jnp.zeros((N, D), jnp.float32)
        for h in range(heads):                               # static unrolled
            sl = slice(h * dh, (h + 1) * dh)
            qs, ks, vs = qb[:, sl], kb[:, sl], vb[:, sl]     # (N, dh)
            # q already carries the 1/sqrt(hid_channels) scaling.
            energy = lax.dot_general(qs, ks, dn_qkT,
                                     preferred_element_type=jnp.float32)  # (N, N)
            m = jnp.max(energy, axis=-1, keepdims=True)
            e = jnp.exp(energy - m)                          # unnormalized probs
            l = jnp.sum(e, axis=-1, keepdims=True)           # (N, 1)
            # Deferred normalization: scale the (N, dh) result, not the (N, N) probs.
            acc = jnp.dot(e, vs, preferred_element_type=jnp.float32) * (1.0 / l)
            # Fold the head-concat into the output projection:
            #   concat_h(acc_h) @ Wp^T == sum_h acc_h @ Wp^T[h*dh:(h+1)*dh, :]
            out_acc = out_acc + jnp.dot(acc, wp_ref[sl, :],
                                        preferred_element_type=jnp.float32)
        o_ref[b] = (out_acc + bp).astype(o_ref.dtype)


def _pick_block_b(B: int, N: int, target_rows: int = 128) -> int:
    """Largest divisor of B such that block_b*N rows ~ target_rows."""
    bt = min(B, max(1, target_rows // max(N, 1)))
    while B % bt != 0:
        bt -= 1
    return bt


def multi_head_attention(x, params, *, heads: int, block_b: int | None = None):
    """x: (B, N, D) float32. params: dict of PyTorch-convention Linear weights."""
    B, N, D = x.shape
    assert D % heads == 0
    if block_b is None:
        block_b = _pick_block_b(B, N)
    assert B % block_b == 0

    scale = jnp.float32(D) ** 0.5      # sqrt(hid_channels), as in the reference module

    # One-time wrapper-side prep: transpose to (in, out), fold scale into q path.
    wq_t = (params["wq"] / scale).T
    bq_s = params["bq"] / scale
    wk_t = params["wk"].T
    wv_t = params["wv"].T
    wp_t = params["wp"].T

    kernel = functools.partial(mha_kernel, heads=heads)

    w_spec = pl.BlockSpec((D, D), lambda i: (0, 0))
    b_spec = pl.BlockSpec((1, D), lambda i: (0, 0))

    return pl.pallas_call(
        kernel,
        out_shape=jax.ShapeDtypeStruct((B, N, D), x.dtype),
        grid_spec=pltpu.PrefetchScalarGridSpec(
            num_scalar_prefetch=0,
            grid=(B // block_b,),
            in_specs=[
                pl.BlockSpec((block_b, N, D), lambda i: (i, 0, 0)),   # x
                w_spec, b_spec,                                        # Wq^T (pre-scaled), bq
                w_spec, b_spec,                                        # Wk^T, bk
                w_spec, b_spec,                                        # Wv^T, bv
                w_spec, b_spec,                                        # Wp^T, bp
            ],
            out_specs=pl.BlockSpec((block_b, N, D), lambda i: (i, 0, 0)),
        ),
        compiler_params=pltpu.CompilerParams(
            dimension_semantics=("parallel",)),
    )(x,
      wq_t, bq_s,
      wk_t, params["bk"],
      wv_t, params["bv"],
      wp_t, params["bp"])


def reference_mha(x, params, *, heads: int):
    """Pure-JAX reference mirroring the PyTorch forward (eval mode, mask=None)."""
    B, N, D = x.shape
    dh = D // heads

    def lin(x, w, b):
        return x @ w.T + b[0]

    q = lin(x, params["wq"], params["bq"]).reshape(B, N, heads, dh).transpose(0, 2, 1, 3)
    k = lin(x, params["wk"], params["bk"]).reshape(B, N, heads, dh).transpose(0, 2, 1, 3)
    v = lin(x, params["wv"], params["bv"]).reshape(B, N, heads, dh).transpose(0, 2, 1, 3)
    energy = jnp.einsum("bhqd,bhkd->bhqk", q, k)
    att = jax.nn.softmax(energy / (D ** 0.5), axis=-1)   # NOTE: sqrt(hid), as in ref
    out = jnp.einsum("bhal,bhlv->bhav", att, v)
    out = out.transpose(0, 2, 1, 3).reshape(B, N, D)
    return lin(out, params["wp"], params["bp"])


def init_params(key, hid_channels):
    """Deterministic PyTorch-style uniform(-1/sqrt(in), 1/sqrt(in)) init."""
    bound = 1.0 / math.sqrt(hid_channels)
    keys = jax.random.split(key, 8)
    u = lambda k, shape: jax.random.uniform(k, shape, jnp.float32, -bound, bound)
    return {
        "wq": u(keys[0], (hid_channels, hid_channels)), "bq": u(keys[1], (1, hid_channels)),
        "wk": u(keys[2], (hid_channels, hid_channels)), "bk": u(keys[3], (1, hid_channels)),
        "wv": u(keys[4], (hid_channels, hid_channels)), "bv": u(keys[5], (1, hid_channels)),
        "wp": u(keys[6], (hid_channels, hid_channels)), "bp": u(keys[7], (1, hid_channels)),
    }


if __name__ == "__main__":
    B, N, D, H = 2, 8, 32, 4          # batch, seq, hid_channels, heads

    root = jax.random.PRNGKey(0)
    kx, kp = jax.random.split(root)
    x = jax.random.normal(kx, (B, N, D), jnp.float32)
    params = init_params(kp, D)

    out = multi_head_attention(x, params, heads=H)
    out = jax.block_until_ready(out)

    ref = reference_mha(x, params, heads=H)
    assert out.shape == (B, N, D)
    assert jnp.allclose(out, ref, atol=2e-5, rtol=2e-5), "mismatch vs JAX reference"

    print("KERNEL_OK")
</pallas_src>

<mosaic_0001>
module attributes {stable_mosaic.version = 11 : i64} {
  func.func @mha_kernel(%arg0: i32, %arg1: memref<2x8x32xf32, #tpu.memory_space<vmem>>, %arg2: memref<32x32xf32, #tpu.memory_space<vmem>>, %arg3: memref<1x32xf32, #tpu.memory_space<vmem>>, %arg4: memref<32x32xf32, #tpu.memory_space<vmem>>, %arg5: memref<1x32xf32, #tpu.memory_space<vmem>>, %arg6: memref<32x32xf32, #tpu.memory_space<vmem>>, %arg7: memref<1x32xf32, #tpu.memory_space<vmem>>, %arg8: memref<32x32xf32, #tpu.memory_space<vmem>>, %arg9: memref<1x32xf32, #tpu.memory_space<vmem>>, %arg10: memref<2x8x32xf32, #tpu.memory_space<vmem>>) attributes {dimension_semantics = [#tpu.dimension_semantics<parallel>], iteration_bounds = array<i64: 1>, scalar_prefetch = 0 : i64, scratch_operands = 0 : i64, tpu.core_type = #tpu.core_type<tc>, window_params = [{transform_indices = @transform_0, window_bounds = array<i64: 2, 8, 32>}, {pipeline_mode = #tpu.pipeline_mode<synchronous>, transform_indices = @transform_1, window_bounds = array<i64: 32, 32>}, {pipeline_mode = #tpu.pipeline_mode<synchronous>, transform_indices = @transform_2, window_bounds = array<i64: 1, 32>}, {pipeline_mode = #tpu.pipeline_mode<synchronous>, transform_indices = @transform_3, window_bounds = array<i64: 32, 32>}, {pipeline_mode = #tpu.pipeline_mode<synchronous>, transform_indices = @transform_4, window_bounds = array<i64: 1, 32>}, {pipeline_mode = #tpu.pipeline_mode<synchronous>, transform_indices = @transform_5, window_bounds = array<i64: 32, 32>}, {pipeline_mode = #tpu.pipeline_mode<synchronous>, transform_indices = @transform_6, window_bounds = array<i64: 1, 32>}, {pipeline_mode = #tpu.pipeline_mode<synchronous>, transform_indices = @transform_7, window_bounds = array<i64: 32, 32>}, {pipeline_mode = #tpu.pipeline_mode<synchronous>, transform_indices = @transform_8, window_bounds = array<i64: 1, 32>}, {transform_indices = @transform_9, window_bounds = array<i64: 2, 8, 32>}]} {
    %c0 = arith.constant 0 : index
    %c0_0 = arith.constant 0 : index
    %c0_1 = arith.constant 0 : index
    %0 = vector.load %arg1[%c0, %c0_0, %c0_1] : memref<2x8x32xf32, #tpu.memory_space<vmem>>, vector<2x8x32xf32>
    %1 = vector.shape_cast %0 : vector<2x8x32xf32> to vector<16x32xf32>
    %c0_2 = arith.constant 0 : index
    %c0_3 = arith.constant 0 : index
    %2 = vector.load %arg2[%c0_2, %c0_3] : memref<32x32xf32, #tpu.memory_space<vmem>>, vector<32x32xf32>
    %cst = arith.constant dense<0.000000e+00> : vector<16x32xf32>
    %3 = tpu.matmul %1, %2, %cst {dimension_numbers = #tpu.dot_dimension_numbers<[1], [0], [0], [1], [0, 0, 1, 1], [], []>} : vector<16x32xf32>, vector<32x32xf32>, vector<16x32xf32> -> vector<16x32xf32>
    %c0_4 = arith.constant 0 : index
    %c0_5 = arith.constant 0 : index
    %4 = vector.load %arg3[%c0_4, %c0_5] : memref<1x32xf32, #tpu.memory_space<vmem>>, vector<1x32xf32>
    %5 = vector.broadcast %4 : vector<1x32xf32> to vector<16x32xf32>
    %6 = arith.addf %3, %5 : vector<16x32xf32>
    %c0_6 = arith.constant 0 : index
    %c0_7 = arith.constant 0 : index
    %7 = vector.load %arg4[%c0_6, %c0_7] : memref<32x32xf32, #tpu.memory_space<vmem>>, vector<32x32xf32>
    %cst_8 = arith.constant dense<0.000000e+00> : vector<16x32xf32>
    %8 = tpu.matmul %1, %7, %cst_8 {dimension_numbers = #tpu.dot_dimension_numbers<[1], [0], [0], [1], [0, 0, 1, 1], [], []>} : vector<16x32xf32>, vector<32x32xf32>, vector<16x32xf32> -> vector<16x32xf32>
    %c0_9 = arith.constant 0 : index
    %c0_10 = arith.constant 0 : index
    %9 = vector.load %arg5[%c0_9, %c0_10] : memref<1x32xf32, #tpu.memory_space<vmem>>, vector<1x32xf32>
    %10 = vector.broadcast %9 : vector<1x32xf32> to vector<16x32xf32>
    %11 = arith.addf %8, %10 : vector<16x32xf32>
    %c0_11 = arith.constant 0 : index
    %c0_12 = arith.constant 0 : index
    %12 = vector.load %arg6[%c0_11, %c0_12] : memref<32x32xf32, #tpu.memory_space<vmem>>, vector<32x32xf32>
    %cst_13 = arith.constant dense<0.000000e+00> : vector<16x32xf32>
    %13 = tpu.matmul %1, %12, %cst_13 {dimension_numbers = #tpu.dot_dimension_numbers<[1], [0], [0], [1], [0, 0, 1, 1], [], []>} : vector<16x32xf32>, vector<32x32xf32>, vector<16x32xf32> -> vector<16x32xf32>
    %c0_14 = arith.constant 0 : index
    %c0_15 = arith.constant 0 : index
    %14 = vector.load %arg7[%c0_14, %c0_15] : memref<1x32xf32, #tpu.memory_space<vmem>>, vector<1x32xf32>
    %15 = vector.broadcast %14 : vector<1x32xf32> to vector<16x32xf32>
    %16 = arith.addf %13, %15 : vector<16x32xf32>
    %17 = vector.shape_cast %6 : vector<16x32xf32> to vector<2x8x32xf32>
    %18 = vector.shape_cast %11 : vector<16x32xf32> to vector<2x8x32xf32>
    %19 = vector.shape_cast %16 : vector<16x32xf32> to vector<2x8x32xf32>
    %c0_16 = arith.constant 0 : index
    %c0_17 = arith.constant 0 : index
    %20 = vector.load %arg9[%c0_16, %c0_17] : memref<1x32xf32, #tpu.memory_space<vmem>>, vector<1x32xf32>
    %21 = vector.extract_strided_slice %17 {offsets = [0, 0, 0], sizes = [1, 8, 32], strides = [1, 1, 1]} : vector<2x8x32xf32> to vector<1x8x32xf32>
    %22 = vector.shape_cast %21 : vector<1x8x32xf32> to vector<8x32xf32>
    %23 = vector.extract_strided_slice %18 {offsets = [0, 0, 0], sizes = [1, 8, 32], strides = [1, 1, 1]} : vector<2x8x32xf32> to vector<1x8x32xf32>
    %24 = vector.shape_cast %23 : vector<1x8x32xf32> to vector<8x32xf32>
    %25 = vector.extract_strided_slice %19 {offsets = [0, 0, 0], sizes = [1, 8, 32], strides = [1, 1, 1]} : vector<2x8x32xf32> to vector<1x8x32xf32>
    %26 = vector.shape_cast %25 : vector<1x8x32xf32> to vector<8x32xf32>
    %cst_18 = arith.constant 0.000000e+00 : f32
    %27 = vector.broadcast %cst_18 : f32 to vector<8x32xf32>
    %28 = vector.extract_strided_slice %22 {offsets = [0, 0], sizes = [8, 8], strides = [1, 1]} : vector<8x32xf32> to vector<8x8xf32>
    %29 = vector.extract_strided_slice %24 {offsets = [0, 0], sizes = [8, 8], strides = [1, 1]} : vector<8x32xf32> to vector<8x8xf32>
    %30 = vector.extract_strided_slice %26 {offsets = [0, 0], sizes = [8, 8], strides = [1, 1]} : vector<8x32xf32> to vector<8x8xf32>
    %cst_19 = arith.constant dense<0.000000e+00> : vector<8x8xf32>
    %31 = tpu.matmul %28, %29, %cst_19 {dimension_numbers = #tpu.dot_dimension_numbers<[1], [1], [0], [0], [0, 0, 1, 0], [], []>} : vector<8x8xf32>, vector<8x8xf32>, vector<8x8xf32> -> vector<8x8xf32>
    %cst_20 = arith.constant dense<0xFF800000> : vector<8xf32>
    %32 = vector.multi_reduction <maximumf>, %31, %cst_20 [1] : vector<8x8xf32> to vector<8xf32>
    %33 = vector.shape_cast %32 : vector<8xf32> to vector<8x1xf32>
    %34 = vector.broadcast %33 : vector<8x1xf32> to vector<8x8xf32>
    %35 = arith.subf %31, %34 : vector<8x8xf32>
    %36 = math.exp %35 : vector<8x8xf32>
    %cst_21 = arith.constant dense<0.000000e+00> : vector<8xf32>
    %37 = vector.multi_reduction <add>, %36, %cst_21 [1] : vector<8x8xf32> to vector<8xf32>
    %38 = vector.shape_cast %37 : vector<8xf32> to vector<8x1xf32>
    %cst_22 = arith.constant dense<0.000000e+00> : vector<8x8xf32>
    %39 = tpu.matmul %36, %30, %cst_22 {dimension_numbers = #tpu.dot_dimension_numbers<[1], [0], [0], [1], [0, 0, 1, 1], [], []>} : vector<8x8xf32>, vector<8x8xf32>, vector<8x8xf32> -> vector<8x8xf32>
    %cst_23 = arith.constant 1.000000e+00 : f32
    %40 = vector.broadcast %cst_23 : f32 to vector<8x1xf32>
    %41 = arith.divf %40, %38 : vector<8x1xf32>
    %42 = vector.broadcast %41 : vector<8x1xf32> to vector<8x8xf32>
    %43 = arith.mulf %39, %42 : vector<8x8xf32>
    %c0_24 = arith.constant 0 : index
    %c0_25 = arith.constant 0 : index
    %44 = vector.load %arg8[%c0_24, %c0_25] : memref<32x32xf32, #tpu.memory_space<vmem>>, vector<8x32xf32>
    %cst_26 = arith.constant dense<0.000000e+00> : vector<8x32xf32>
    %45 = tpu.matmul %43, %44, %cst_26 {dimension_numbers = #tpu.dot_dimension_numbers<[1], [0], [0], [1], [0, 0, 1, 1], [], []>} : vector<8x8xf32>, vector<8x32xf32>, vector<8x32xf32> -> vector<8x32xf32>
    %46 = arith.addf %27, %45 : vector<8x32xf32>
    %47 = vector.extract_strided_slice %22 {offsets = [0, 8], sizes = [8, 8], strides = [1, 1]} : vector<8x32xf32> to vector<8x8xf32>
    %48 = vector.extract_strided_slice %24 {offsets = [0, 8], sizes = [8, 8], strides = [1, 1]} : vector<8x32xf32> to vector<8x8xf32>
    %49 = vector.extract_strided_slice %26 {offsets = [0, 8], sizes = [8, 8], strides = [1, 1]} : vector<8x32xf32> to vector<8x8xf32>
    %cst_27 = arith.constant dense<0.000000e+00> : vector<8x8xf32>
    %50 = tpu.matmul %47, %48, %cst_27 {dimension_numbers = #tpu.dot_dimension_numbers<[1], [1], [0], [0], [0, 0, 1, 0], [], []>} : vector<8x8xf32>, vector<8x8xf32>, vector<8x8xf32> -> vector<8x8xf32>
    %cst_28 = arith.constant dense<0xFF800000> : vector<8xf32>
    %51 = vector.multi_reduction <maximumf>, %50, %cst_28 [1] : vector<8x8xf32> to vector<8xf32>
    %52 = vector.shape_cast %51 : vector<8xf32> to vector<8x1xf32>
    %53 = vector.broadcast %52 : vector<8x1xf32> to vector<8x8xf32>
    %54 = arith.subf %50, %53 : vector<8x8xf32>
    %55 = math.exp %54 : vector<8x8xf32>
    %cst_29 = arith.constant dense<0.000000e+00> : vector<8xf32>
    %56 = vector.multi_reduction <add>, %55, %cst_29 [1] : vector<8x8xf32> to vector<8xf32>
    %57 = vector.shape_cast %56 : vector<8xf32> to vector<8x1xf32>
    %cst_30 = arith.constant dense<0.000000e+00> : vector<8x8xf32>
    %58 = tpu.matmul %55, %49, %cst_30 {dimension_numbers = #tpu.dot_dimension_numbers<[1], [0], [0], [1], [0, 0, 1, 1], [], []>} : vector<8x8xf32>, vector<8x8xf32>, vector<8x8xf32> -> vector<8x8xf32>
    %cst_31 = arith.constant 1.000000e+00 : f32
    %59 = vector.broadcast %cst_31 : f32 to vector<8x1xf32>
    %60 = arith.divf %59, %57 : vector<8x1xf32>
    %61 = vector.broadcast %60 : vector<8x1xf32> to vector<8x8xf32>
    %62 = arith.mulf %58, %61 : vector<8x8xf32>
    %c8 = arith.constant 8 : index
    %c0_32 = arith.constant 0 : index
    %63 = vector.load %arg8[%c8, %c0_32] : memref<32x32xf32, #tpu.memory_space<vmem>>, vector<8x32xf32>
    %cst_33 = arith.constant dense<0.000000e+00> : vector<8x32xf32>
    %64 = tpu.matmul %62, %63, %cst_33 {dimension_numbers = #tpu.dot_dimension_numbers<[1], [0], [0], [1], [0, 0, 1, 1], [], []>} : vector<8x8xf32>, vector<8x32xf32>, vector<8x32xf32> -> vector<8x32xf32>
    %65 = arith.addf %46, %64 : vector<8x32xf32>
    %66 = vector.extract_strided_slice %22 {offsets = [0, 16], sizes = [8, 8], strides = [1, 1]} : vector<8x32xf32> to vector<8x8xf32>
    %67 = vector.extract_strided_slice %24 {offsets = [0, 16], sizes = [8, 8], strides = [1, 1]} : vector<8x32xf32> to vector<8x8xf32>
    %68 = vector.extract_strided_slice %26 {offsets = [0, 16], sizes = [8, 8], strides = [1, 1]} : vector<8x32xf32> to vector<8x8xf32>
    %cst_34 = arith.constant dense<0.000000e+00> : vector<8x8xf32>
    %69 = tpu.matmul %66, %67, %cst_34 {dimension_numbers = #tpu.dot_dimension_numbers<[1], [1], [0], [0], [0, 0, 1, 0], [], []>} : vector<8x8xf32>, vector<8x8xf32>, vector<8x8xf32> -> vector<8x8xf32>
    %cst_35 = arith.constant dense<0xFF800000> : vector<8xf32>
    %70 = vector.multi_reduction <maximumf>, %69, %cst_35 [1] : vector<8x8xf32> to vector<8xf32>
    %71 = vector.shape_cast %70 : vector<8xf32> to vector<8x1xf32>
    %72 = vector.broadcast %71 : vector<8x1xf32> to vector<8x8xf32>
    %73 = arith.subf %69, %72 : vector<8x8xf32>
    %74 = math.exp %73 : vector<8x8xf32>
    %cst_36 = arith.constant dense<0.000000e+00> : vector<8xf32>
    %75 = vector.multi_reduction <add>, %74, %cst_36 [1] : vector<8x8xf32> to vector<8xf32>
    %76 = vector.shape_cast %75 : vector<8xf32> to vector<8x1xf32>
    %cst_37 = arith.constant dense<0.000000e+00> : vector<8x8xf32>
    %77 = tpu.matmul %74, %68, %cst_37 {dimension_numbers = #tpu.dot_dimension_numbers<[1], [0], [0], [1], [0, 0, 1, 1], [], []>} : vector<8x8xf32>, vector<8x8xf32>, vector<8x8xf32> -> vector<8x8xf32>
    %cst_38 = arith.constant 1.000000e+00 : f32
    %78 = vector.broadcast %cst_38 : f32 to vector<8x1xf32>
    %79 = arith.divf %78, %76 : vector<8x1xf32>
    %80 = vector.broadcast %79 : vector<8x1xf32> to vector<8x8xf32>
    %81 = arith.mulf %77, %80 : vector<8x8xf32>
    %c16 = arith.constant 16 : index
    %c0_39 = arith.constant 0 : index
    %82 = vector.load %arg8[%c16, %c0_39] : memref<32x32xf32, #tpu.memory_space<vmem>>, vector<8x32xf32>
    %cst_40 = arith.constant dense<0.000000e+00> : vector<8x32xf32>
    %83 = tpu.matmul %81, %82, %cst_40 {dimension_numbers = #tpu.dot_dimension_numbers<[1], [0], [0], [1], [0, 0, 1, 1], [], []>} : vector<8x8xf32>, vector<8x32xf32>, vector<8x32xf32> -> vector<8x32xf32>
    %84 = arith.addf %65, %83 : vector<8x32xf32>
    %85 = vector.extract_strided_slice %22 {offsets = [0, 24], sizes = [8, 8], strides = [1, 1]} : vector<8x32xf32> to vector<8x8xf32>
    %86 = vector.extract_strided_slice %24 {offsets = [0, 24], sizes = [8, 8], strides = [1, 1]} : vector<8x32xf32> to vector<8x8xf32>
    %87 = vector.extract_strided_slice %26 {offsets = [0, 24], sizes = [8, 8], strides = [1, 1]} : vector<8x32xf32> to vector<8x8xf32>
    %cst_41 = arith.constant dense<0.000000e+00> : vector<8x8xf32>
    %88 = tpu.matmul %85, %86, %cst_41 {dimension_numbers = #tpu.dot_dimension_numbers<[1], [1], [0], [0], [0, 0, 1, 0], [], []>} : vector<8x8xf32>, vector<8x8xf32>, vector<8x8xf32> -> vector<8x8xf32>
    %cst_42 = arith.constant dense<0xFF800000> : vector<8xf32>
    %89 = vector.multi_reduction <maximumf>, %88, %cst_42 [1] : vector<8x8xf32> to vector<8xf32>
    %90 = vector.shape_cast %89 : vector<8xf32> to vector<8x1xf32>
    %91 = vector.broadcast %90 : vector<8x1xf32> to vector<8x8xf32>
    %92 = arith.subf %88, %91 : vector<8x8xf32>
    %93 = math.exp %92 : vector<8x8xf32>
    %cst_43 = arith.constant dense<0.000000e+00> : vector<8xf32>
    %94 = vector.multi_reduction <add>, %93, %cst_43 [1] : vector<8x8xf32> to vector<8xf32>
    %95 = vector.shape_cast %94 : vector<8xf32> to vector<8x1xf32>
    %cst_44 = arith.constant dense<0.000000e+00> : vector<8x8xf32>
    %96 = tpu.matmul %93, %87, %cst_44 {dimension_numbers = #tpu.dot_dimension_numbers<[1], [0], [0], [1], [0, 0, 1, 1], [], []>} : vector<8x8xf32>, vector<8x8xf32>, vector<8x8xf32> -> vector<8x8xf32>
    %cst_45 = arith.constant 1.000000e+00 : f32
    %97 = vector.broadcast %cst_45 : f32 to vector<8x1xf32>
    %98 = arith.divf %97, %95 : vector<8x1xf32>
    %99 = vector.broadcast %98 : vector<8x1xf32> to vector<8x8xf32>
    %100 = arith.mulf %96, %99 : vector<8x8xf32>
    %c24 = arith.constant 24 : index
    %c0_46 = arith.constant 0 : index
    %101 = vector.load %arg8[%c24, %c0_46] : memref<32x32xf32, #tpu.memory_space<vmem>>, vector<8x32xf32>
    %cst_47 = arith.constant dense<0.000000e+00> : vector<8x32xf32>
    %102 = tpu.matmul %100, %101, %cst_47 {dimension_numbers = #tpu.dot_dimension_numbers<[1], [0], [0], [1], [0, 0, 1, 1], [], []>} : vector<8x8xf32>, vector<8x32xf32>, vector<8x32xf32> -> vector<8x32xf32>
    %103 = arith.addf %84, %102 : vector<8x32xf32>
    %104 = vector.broadcast %20 : vector<1x32xf32> to vector<8x32xf32>
    %105 = arith.addf %103, %104 : vector<8x32xf32>
    %c0_48 = arith.constant 0 : index
    %c0_49 = arith.constant 0 : index
    %c0_50 = arith.constant 0 : index
    %106 = vector.load %arg10[%c0_48, %c0_49, %c0_50] : memref<2x8x32xf32, #tpu.memory_space<vmem>>, vector<1x8x32xf32>
    %107 = vector.shape_cast %106 : vector<1x8x32xf32> to vector<8x32xf32>
    %108 = vector.shape_cast %105 : vector<8x32xf32> to vector<1x8x32xf32>
    tpu.vector_store %arg10[%c0_48, %c0_49, %c0_50], %108 {strides = array<i32>} : memref<2x8x32xf32, #tpu.memory_space<vmem>>, vector<1x8x32xf32>,
    %109 = vector.extract_strided_slice %17 {offsets = [1, 0, 0], sizes = [1, 8, 32], strides = [1, 1, 1]} : vector<2x8x32xf32> to vector<1x8x32xf32>
    %110 = vector.shape_cast %109 : vector<1x8x32xf32> to vector<8x32xf32>
    %111 = vector.extract_strided_slice %18 {offsets = [1, 0, 0], sizes = [1, 8, 32], strides = [1, 1, 1]} : vector<2x8x32xf32> to vector<1x8x32xf32>
    %112 = vector.shape_cast %111 : vector<1x8x32xf32> to vector<8x32xf32>
    %113 = vector.extract_strided_slice %19 {offsets = [1, 0, 0], sizes = [1, 8, 32], strides = [1, 1, 1]} : vector<2x8x32xf32> to vector<1x8x32xf32>
    %114 = vector.shape_cast %113 : vector<1x8x32xf32> to vector<8x32xf32>
    %cst_51 = arith.constant 0.000000e+00 : f32
    %115 = vector.broadcast %cst_51 : f32 to vector<8x32xf32>
    %116 = vector.extract_strided_slice %110 {offsets = [0, 0], sizes = [8, 8], strides = [1, 1]} : vector<8x32xf32> to vector<8x8xf32>
    %117 = vector.extract_strided_slice %112 {offsets = [0, 0], sizes = [8, 8], strides = [1, 1]} : vector<8x32xf32> to vector<8x8xf32>
    %118 = vector.extract_strided_slice %114 {offsets = [0, 0], sizes = [8, 8], strides = [1, 1]} : vector<8x32xf32> to vector<8x8xf32>
    %cst_52 = arith.constant dense<0.000000e+00> : vector<8x8xf32>
    %119 = tpu.matmul %116, %117, %cst_52 {dimension_numbers = #tpu.dot_dimension_numbers<[1], [1], [0], [0], [0, 0, 1, 0], [], []>} : vector<8x8xf32>, vector<8x8xf32>, vector<8x8xf32> -> vector<8x8xf32>
    %cst_53 = arith.constant dense<0xFF800000> : vector<8xf32>
    %120 = vector.multi_reduction <maximumf>, %119, %cst_53 [1] : vector<8x8xf32> to vector<8xf32>
    %121 = vector.shape_cast %120 : vector<8xf32> to vector<8x1xf32>
    %122 = vector.broadcast %121 : vector<8x1xf32> to vector<8x8xf32>
    %123 = arith.subf %119, %122 : vector<8x8xf32>
    %124 = math.exp %123 : vector<8x8xf32>
    %cst_54 = arith.constant dense<0.000000e+00> : vector<8xf32>
    %125 = vector.multi_reduction <add>, %124, %cst_54 [1] : vector<8x8xf32> to vector<8xf32>
    %126 = vector.shape_cast %125 : vector<8xf32> to vector<8x1xf32>
    %cst_55 = arith.constant dense<0.000000e+00> : vector<8x8xf32>
    %127 = tpu.matmul %124, %118, %cst_55 {dimension_numbers = #tpu.dot_dimension_numbers<[1], [0], [0], [1], [0, 0, 1, 1], [], []>} : vector<8x8xf32>, vector<8x8xf32>, vector<8x8xf32> -> vector<8x8xf32>
    %cst_56 = arith.constant 1.000000e+00 : f32
    %128 = vector.broadcast %cst_56 : f32 to vector<8x1xf32>
    %129 = arith.divf %128, %126 : vector<8x1xf32>
    %130 = vector.broadcast %129 : vector<8x1xf32> to vector<8x8xf32>
    %131 = arith.mulf %127, %130 : vector<8x8xf32>
    %c0_57 = arith.constant 0 : index
    %c0_58 = arith.constant 0 : index
    %132 = vector.load %arg8[%c0_57, %c0_58] : memref<32x32xf32, #tpu.memory_space<vmem>>, vector<8x32xf32>
    %cst_59 = arith.constant dense<0.000000e+00> : vector<8x32xf32>
    %133 = tpu.matmul %131, %132, %cst_59 {dimension_numbers = #tpu.dot_dimension_numbers<[1], [0], [0], [1], [0, 0, 1, 1], [], []>} : vector<8x8xf32>, vector<8x32xf32>, vector<8x32xf32> -> vector<8x32xf32>
    %134 = arith.addf %115, %133 : vector<8x32xf32>
    %135 = vector.extract_strided_slice %110 {offsets = [0, 8], sizes = [8, 8], strides = [1, 1]} : vector<8x32xf32> to vector<8x8xf32>
    %136 = vector.extract_strided_slice %112 {offsets = [0, 8], sizes = [8, 8], strides = [1, 1]} : vector<8x32xf32> to vector<8x8xf32>
    %137 = vector.extract_strided_slice %114 {offsets = [0, 8], sizes = [8, 8], strides = [1, 1]} : vector<8x32xf32> to vector<8x8xf32>
    %cst_60 = arith.constant dense<0.000000e+00> : vector<8x8xf32>
    %138 = tpu.matmul %135, %136, %cst_60 {dimension_numbers = #tpu.dot_dimension_numbers<[1], [1], [0], [0], [0, 0, 1, 0], [], []>} : vector<8x8xf32>, vector<8x8xf32>, vector<8x8xf32> -> vector<8x8xf32>
    %cst_61 = arith.constant dense<0xFF800000> : vector<8xf32>
    %139 = vector.multi_reduction <maximumf>, %138, %cst_61 [1] : vector<8x8xf32> to vector<8xf32>
    %140 = vector.shape_cast %139 : vector<8xf32> to vector<8x1xf32>
    %141 = vector.broadcast %140 : vector<8x1xf32> to vector<8x8xf32>
    %142 = arith.subf %138, %141 : vector<8x8xf32>
    %143 = math.exp %142 : vector<8x8xf32>
    %cst_62 = arith.constant dense<0.000000e+00> : vector<8xf32>
    %144 = vector.multi_reduction <add>, %143, %cst_62 [1] : vector<8x8xf32> to vector<8xf32>
    %145 = vector.shape_cast %144 : vector<8xf32> to vector<8x1xf32>
    %cst_63 = arith.constant dense<0.000000e+00> : vector<8x8xf32>
    %146 = tpu.matmul %143, %137, %cst_63 {dimension_numbers = #tpu.dot_dimension_numbers<[1], [0], [0], [1], [0, 0, 1, 1], [], []>} : vector<8x8xf32>, vector<8x8xf32>, vector<8x8xf32> -> vector<8x8xf32>
    %cst_64 = arith.constant 1.000000e+00 : f32
    %147 = vector.broadcast %cst_64 : f32 to vector<8x1xf32>
    %148 = arith.divf %147, %145 : vector<8x1xf32>
    %149 = vector.broadcast %148 : vector<8x1xf32> to vector<8x8xf32>
    %150 = arith.mulf %146, %149 : vector<8x8xf32>
    %c8_65 = arith.constant 8 : index
    %c0_66 = arith.constant 0 : index
    %151 = vector.load %arg8[%c8_65, %c0_66] : memref<32x32xf32, #tpu.memory_space<vmem>>, vector<8x32xf32>
    %cst_67 = arith.constant dense<0.000000e+00> : vector<8x32xf32>
    %152 = tpu.matmul %150, %151, %cst_67 {dimension_numbers = #tpu.dot_dimension_numbers<[1], [0], [0], [1], [0, 0, 1, 1], [], []>} : vector<8x8xf32>, vector<8x32xf32>, vector<8x32xf32> -> vector<8x32xf32>
    %153 = arith.addf %134, %152 : vector<8x32xf32>
    %154 = vector.extract_strided_slice %110 {offsets = [0, 16], sizes = [8, 8], strides = [1, 1]} : vector<8x32xf32> to vector<8x8xf32>
    %155 = vector.extract_strided_slice %112 {offsets = [0, 16], sizes = [8, 8], strides = [1, 1]} : vector<8x32xf32> to vector<8x8xf32>
    %156 = vector.extract_strided_slice %114 {offsets = [0, 16], sizes = [8, 8], strides = [1, 1]} : vector<8x32xf32> to vector<8x8xf32>
    %cst_68 = arith.constant dense<0.000000e+00> : vector<8x8xf32>
    %157 = tpu.matmul %154, %155, %cst_68 {dimension_numbers = #tpu.dot_dimension_numbers<[1], [1], [0], [0], [0, 0, 1, 0], [], []>} : vector<8x8xf32>, vector<8x8xf32>, vector<8x8xf32> -> vector<8x8xf32>
    %cst_69 = arith.constant dense<0xFF800000> : vector<8xf32>
    %158 = vector.multi_reduction <maximumf>, %157, %cst_69 [1] : vector<8x8xf32> to vector<8xf32>
    %159 = vector.shape_cast %158 : vector<8xf32> to vector<8x1xf32>
    %160 = vector.broadcast %159 : vector<8x1xf32> to vector<8x8xf32>
    %161 = arith.subf %157, %160 : vector<8x8xf32>
    %162 = math.exp %161 : vector<8x8xf32>
    %cst_70 = arith.constant dense<0.000000e+00> : vector<8xf32>
    %163 = vector.multi_reduction <add>, %162, %cst_70 [1] : vector<8x8xf32> to vector<8xf32>
    %164 = vector.shape_cast %163 : vector<8xf32> to vector<8x1xf32>
    %cst_71 = arith.constant dense<0.000000e+00> : vector<8x8xf32>
    %165 = tpu.matmul %162, %156, %cst_71 {dimension_numbers = #tpu.dot_dimension_numbers<[1], [0], [0], [1], [0, 0, 1, 1], [], []>} : vector<8x8xf32>, vector<8x8xf32>, vector<8x8xf32> -> vector<8x8xf32>
    %cst_72 = arith.constant 1.000000e+00 : f32
    %166 = vector.broadcast %cst_72 : f32 to vector<8x1xf32>
    %167 = arith.divf %166, %164 : vector<8x1xf32>
    %168 = vector.broadcast %167 : vector<8x1xf32> to vector<8x8xf32>
    %169 = arith.mulf %165, %168 : vector<8x8xf32>
    %c16_73 = arith.constant 16 : index
    %c0_74 = arith.constant 0 : index
    %170 = vector.load %arg8[%c16_73, %c0_74] : memref<32x32xf32, #tpu.memory_space<vmem>>, vector<8x32xf32>
    %cst_75 = arith.constant dense<0.000000e+00> : vector<8x32xf32>
    %171 = tpu.matmul %169, %170, %cst_75 {dimension_numbers = #tpu.dot_dimension_numbers<[1], [0], [0], [1], [0, 0, 1, 1], [], []>} : vector<8x8xf32>, vector<8x32xf32>, vector<8x32xf32> -> vector<8x32xf32>
    %172 = arith.addf %153, %171 : vector<8x32xf32>
    %173 = vector.extract_strided_slice %110 {offsets = [0, 24], sizes = [8, 8], strides = [1, 1]} : vector<8x32xf32> to vector<8x8xf32>
    %174 = vector.extract_strided_slice %112 {offsets = [0, 24], sizes = [8, 8], strides = [1, 1]} : vector<8x32xf32> to vector<8x8xf32>
    %175 = vector.extract_strided_slice %114 {offsets = [0, 24], sizes = [8, 8], strides = [1, 1]} : vector<8x32xf32> to vector<8x8xf32>
    %cst_76 = arith.constant dense<0.000000e+00> : vector<8x8xf32>
    %176 = tpu.matmul %173, %174, %cst_76 {dimension_numbers = #tpu.dot_dimension_numbers<[1], [1], [0], [0], [0, 0, 1, 0], [], []>} : vector<8x8xf32>, vector<8x8xf32>, vector<8x8xf32> -> vector<8x8xf32>
    %cst_77 = arith.constant dense<0xFF800000> : vector<8xf32>
    %177 = vector.multi_reduction <maximumf>, %176, %cst_77 [1] : vector<8x8xf32> to vector<8xf32>
    %178 = vector.shape_cast %177 : vector<8xf32> to vector<8x1xf32>
    %179 = vector.broadcast %178 : vector<8x1xf32> to vector<8x8xf32>
    %180 = arith.subf %176, %179 : vector<8x8xf32>
    %181 = math.exp %180 : vector<8x8xf32>
    %cst_78 = arith.constant dense<0.000000e+00> : vector<8xf32>
    %182 = vector.multi_reduction <add>, %181, %cst_78 [1] : vector<8x8xf32> to vector<8xf32>
    %183 = vector.shape_cast %182 : vector<8xf32> to vector<8x1xf32>
    %cst_79 = arith.constant dense<0.000000e+00> : vector<8x8xf32>
    %184 = tpu.matmul %181, %175, %cst_79 {dimension_numbers = #tpu.dot_dimension_numbers<[1], [0], [0], [1], [0, 0, 1, 1], [], []>} : vector<8x8xf32>, vector<8x8xf32>, vector<8x8xf32> -> vector<8x8xf32>
    %cst_80 = arith.constant 1.000000e+00 : f32
    %185 = vector.broadcast %cst_80 : f32 to vector<8x1xf32>
    %186 = arith.divf %185, %183 : vector<8x1xf32>
    %187 = vector.broadcast %186 : vector<8x1xf32> to vector<8x8xf32>
    %188 = arith.mulf %184, %187 : vector<8x8xf32>
    %c24_81 = arith.constant 24 : index
    %c0_82 = arith.constant 0 : index
    %189 = vector.load %arg8[%c24_81, %c0_82] : memref<32x32xf32, #tpu.memory_space<vmem>>, vector<8x32xf32>
    %cst_83 = arith.constant dense<0.000000e+00> : vector<8x32xf32>
    %190 = tpu.matmul %188, %189, %cst_83 {dimension_numbers = #tpu.dot_dimension_numbers<[1], [0], [0], [1], [0, 0, 1, 1], [], []>} : vector<8x8xf32>, vector<8x32xf32>, vector<8x32xf32> -> vector<8x32xf32>
    %191 = arith.addf %172, %190 : vector<8x32xf32>
    %192 = vector.broadcast %20 : vector<1x32xf32> to vector<8x32xf32>
    %193 = arith.addf %191, %192 : vector<8x32xf32>
    %c1 = arith.constant 1 : index
    %c0_84 = arith.constant 0 : index
    %c0_85 = arith.constant 0 : index
    %194 = vector.load %arg10[%c1, %c0_84, %c0_85] : memref<2x8x32xf32, #tpu.memory_space<vmem>>, vector<1x8x32xf32>
    %195 = vector.shape_cast %194 : vector<1x8x32xf32> to vector<8x32xf32>
    %196 = vector.shape_cast %193 : vector<8x32xf32> to vector<1x8x32xf32>
    tpu.vector_store %arg10[%c1, %c0_84, %c0_85], %196 {strides = array<i32>} : memref<2x8x32xf32, #tpu.memory_space<vmem>>, vector<1x8x32xf32>,
    return
  }
  func.func @transform_0(%arg0: i32) -> (i32, i32, i32) {
    %c0_i32 = arith.constant 0 : i32
    %c0_i32_0 = arith.constant 0 : i32
    %c0_i32_1 = arith.constant 0 : i32
    return %arg0, %c0_i32, %c0_i32_0 : i32, i32, i32
  }
  func.func @transform_1(%arg0: i32) -> (i32, i32) {
    %c0_i32 = arith.constant 0 : i32
    %c0_i32_0 = arith.constant 0 : i32
    %c0_i32_1 = arith.constant 0 : i32
    return %c0_i32, %c0_i32_0 : i32, i32
  }
  func.func @transform_2(%arg0: i32) -> (i32, i32) {
    %c0_i32 = arith.constant 0 : i32
    %c0_i32_0 = arith.constant 0 : i32
    %c0_i32_1 = arith.constant 0 : i32
    return %c0_i32, %c0_i32_0 : i32, i32
  }
  func.func @transform_3(%arg0: i32) -> (i32, i32) {
    %c0_i32 = arith.constant 0 : i32
    %c0_i32_0 = arith.constant 0 : i32
    %c0_i32_1 = arith.constant 0 : i32
    return %c0_i32, %c0_i32_0 : i32, i32
  }
  func.func @transform_4(%arg0: i32) -> (i32, i32) {
    %c0_i32 = arith.constant 0 : i32
    %c0_i32_0 = arith.constant 0 : i32
    %c0_i32_1 = arith.constant 0 : i32
    return %c0_i32, %c0_i32_0 : i32, i32
  }
  func.func @transform_5(%arg0: i32) -> (i32, i32) {
    %c0_i32 = arith.constant 0 : i32
    %c0_i32_0 = arith.constant 0 : i32
    %c0_i32_1 = arith.constant 0 : i32
    return %c0_i32, %c0_i32_0 : i32, i32
  }
  func.func @transform_6(%arg0: i32) -> (i32, i32) {
    %c0_i32 = arith.constant 0 : i32
    %c0_i32_0 = arith.constant 0 : i32
    %c0_i32_1 = arith.constant 0 : i32
    return %c0_i32, %c0_i32_0 : i32, i32
  }
  func.func @transform_7(%arg0: i32) -> (i32, i32) {
    %c0_i32 = arith.constant 0 : i32
    %c0_i32_0 = arith.constant 0 : i32
    %c0_i32_1 = arith.constant 0 : i32
    return %c0_i32, %c0_i32_0 : i32, i32
  }
  func.func @transform_8(%arg0: i32) -> (i32, i32) {
    %c0_i32 = arith.constant 0 : i32
    %c0_i32_0 = arith.constant 0 : i32
    %c0_i32_1 = arith.constant 0 : i32
    return %c0_i32, %c0_i32_0 : i32, i32
  }
  func.func @transform_9(%arg0: i32) -> (i32, i32, i32) {
    %c0_i32 = arith.constant 0 : i32
    %c0_i32_0 = arith.constant 0 : i32
    %c0_i32_1 = arith.constant 0 : i32
    return %arg0, %c0_i32, %c0_i32_0 : i32, i32, i32
  }
}

</mosaic_0001>

<llo_original>
// kernel: tpu_custom_call.1
$region0: #{tpu_custom_call.1}
  #allocation0 [shape = 'u32[]', space=smem, size = 0x4, offset = 0x4, fixed_abs, tag = 'smem constant byte address 0x4 - core index']
  #allocation1 [shape = 'u32[72,128]{1,0:T(1,128)}', space=vmem, size = 0x9000, scoped, tag = 'internal scratch']
  %s0 = inlined_call_operand.hbm [shape: f32[2,8,32], index: 0, kind: input, shape index: {}]
  %s1 = inlined_call_operand.hbm [shape: f32[32,32], index: 1, kind: input, shape index: {}]
  %s2 = inlined_call_operand.vmem [shape: f32[1,32], index: 2, kind: input, shape index: {}]
  %s3 = inlined_call_operand.hbm [shape: f32[32,32], index: 3, kind: input, shape index: {}]
  %s4 = inlined_call_operand.vmem [shape: f32[1,32], index: 4, kind: input, shape index: {}]
  %s5 = inlined_call_operand.hbm [shape: f32[32,32], index: 5, kind: input, shape index: {}]
  %s6 = inlined_call_operand.vmem [shape: f32[1,32], index: 6, kind: input, shape index: {}]
  %s7 = inlined_call_operand.hbm [shape: f32[32,32], index: 7, kind: input, shape index: {}]
  %s8 = inlined_call_operand.vmem [shape: f32[1,32], index: 8, kind: input, shape index: {}]
  %s9 = inlined_call_operand.hbm [shape: f32[2,8,32], index: 9, kind: output, shape index: {}]
  %s10 = sld [smem:[#allocation0]]
  $region66: #{tpu_custom_call.1} parent=0
    _
  %s12 = ssub.s32 1, %s10
  %s13 = scalar_select 0, %s12, %s10
  $region1: #{tpu_custom_call.1} parent=0
    #allocation2 [shape = 'u8[8192]{0}', space=vmem, size = 0x2000, scoped, tag = 'input window, operand 0, single buffered']
    #allocation3 [shape = 's32[1]{0}', space=sflag, size = 0x4, scoped, tag = 'scoped memory for tpu_custom_call.1']
    #allocation4 [shape = 's32[1]{0}', space=sflag, size = 0x4, scoped, tag = 'scoped memory for tpu_custom_call.1']
    #allocation5 [shape = 'u8[16384]{0}', space=vmem, size = 0x4000, scoped, tag = 'input window, operand 1, single buffered']
    #allocation6 [shape = 's32[1]{0}', space=sflag, size = 0x4, scoped, tag = 'scoped memory for tpu_custom_call.1']
    #allocation7 [shape = 'u8[16384]{0}', space=vmem, size = 0x4000, scoped, tag = 'input window, operand 3, single buffered']
    #allocation8 [shape = 'u8[16384]{0}', space=vmem, size = 0x4000, scoped, tag = 'input window, operand 5, single buffered']
    #allocation9 [shape = 's32[1]{0}', space=sflag, size = 0x4, scoped, tag = 'scoped memory for tpu_custom_call.1']
    #allocation10 [shape = 'u8[16384]{0}', space=vmem, size = 0x4000, scoped, tag = 'input window, operand 7, single buffered']
    #allocation11 [shape = 'u8[8192]{0}', space=vmem, size = 0x2000, scoped, tag = 'output window, operand 0, single buffered']
    %14 = vsyncpa [#allocation3], 0
    %15 = vsyncpa [#allocation6], 0
    %16 = vsyncpa [#allocation9], 0
    %17 = vsyncpa [#allocation4], 0
    // Predicated region
    $region2: #{tpu_custom_call.1} parent=1 // pred_check
      _
    $region3: #{tpu_custom_call.1} parent=1 // pred_check_branch
      %19 = sbr.rel (0) target = $region5
    $region4: #{tpu_custom_call.1} parent=1 // pred_region
      %21 = vsyncadd [#allocation3], 0
      %s22 = sshll.u32 %s0, 4
      %s23 = int_to_ptr.hbm [resolvable:$true] %s22
      %s24 = sshll.u32 [#allocation2], 4
      %s25 = int_to_ptr.vmem [resolvable:$true] %s24
      %30 = dma.hbm_to_vmem [thread:$0]  %s23, 256, %s25, [#allocation3], 128, 128, 8
    $region5: #{tpu_custom_call.1} parent=1 // pred_fallthru
      _
    // Predicated region
    $region6: #{tpu_custom_call.1} parent=1 // pred_check
      _
    $region7: #{tpu_custom_call.1} parent=1 // pred_check_branch
      %32 = sbr.rel (0) target = $region9
    $region8: #{tpu_custom_call.1} parent=1 // pred_region
      %34 = vsyncadd [#allocation6], 0
      %s35 = sshll.u32 %s1, 4
      %s36 = int_to_ptr.hbm [resolvable:$true] %s35
      %s37 = sshll.u32 [#allocation5], 4
      %s38 = int_to_ptr.vmem [resolvable:$true] %s37
      %43 = dma.hbm_to_vmem [thread:$0]  %s36, 512, %s38, [#allocation6], 128, 128, 8
    $region9: #{tpu_custom_call.1} parent=1 // pred_fallthru
      _
    // Predicated region
    $region10: #{tpu_custom_call.1} parent=1 // pred_check
      _
    $region11: #{tpu_custom_call.1} parent=1 // pred_check_branch
      %45 = sbr.rel (0) target = $region13
    $region12: #{tpu_custom_call.1} parent=1 // pred_region
      _
    $region13: #{tpu_custom_call.1} parent=1 // pred_fallthru
      _
    // Predicated region
    $region14: #{tpu_custom_call.1} parent=1 // pred_check
      _
    $region15: #{tpu_custom_call.1} parent=1 // pred_check_branch
      %47 = sbr.rel (0) target = $region17
    $region16: #{tpu_custom_call.1} parent=1 // pred_region
      %49 = vsyncadd [#allocation6], 0
      %s50 = sshll.u32 %s3, 4
      %s51 = int_to_ptr.hbm [resolvable:$true] %s50
      %s52 = sshll.u32 [#allocation7], 4
      %s53 = int_to_ptr.vmem [resolvable:$true] %s52
      %58 = dma.hbm_to_vmem [thread:$0]  %s51, 512, %s53, [#allocation6], 128, 128, 8
    $region17: #{tpu_custom_call.1} parent=1 // pred_fallthru
      _
    // Predicated region
    $region18: #{tpu_custom_call.1} parent=1 // pred_check
      _
    $region19: #{tpu_custom_call.1} parent=1 // pred_check_branch
      %60 = sbr.rel (0) target = $region21
    $region20: #{tpu_custom_call.1} parent=1 // pred_region
      _
    $region21: #{tpu_custom_call.1} parent=1 // pred_fallthru
      _
    // Predicated region
    $region22: #{tpu_custom_call.1} parent=1 // pred_check
      _
    $region23: #{tpu_custom_call.1} parent=1 // pred_check_branch
      %62 = sbr.rel (0) target = $region25
    $region24: #{tpu_custom_call.1} parent=1 // pred_region
      %64 = vsyncadd [#allocation9], 0
      %s65 = sshll.u32 %s5, 4
      %s66 = int_to_ptr.hbm [resolvable:$true] %s65
      %s67 = sshll.u32 [#allocation8], 4
      %s68 = int_to_ptr.vmem [resolvable:$true] %s67
      %73 = dma.hbm_to_vmem [thread:$0]  %s66, 512, %s68, [#allocation9], 128, 128, 8
    $region25: #{tpu_custom_call.1} parent=1 // pred_fallthru
      _
    // Predicated region
    $region26: #{tpu_custom_call.1} parent=1 // pred_check
      _
    $region27: #{tpu_custom_call.1} parent=1 // pred_check_branch
      %75 = sbr.rel (0) target = $region29
    $region28: #{tpu_custom_call.1} parent=1 // pred_region
      _
    $region29: #{tpu_custom_call.1} parent=1 // pred_fallthru
      _
    // Predicated region
    $region30: #{tpu_custom_call.1} parent=1 // pred_check
      _
    $region31: #{tpu_custom_call.1} parent=1 // pred_check_branch
      %77 = sbr.rel (0) target = $region33
    $region32: #{tpu_custom_call.1} parent=1 // pred_region
      %79 = vsyncadd [#allocation9], 0
      %s80 = sshll.u32 %s7, 4
      %s81 = int_to_ptr.hbm [resolvable:$true] %s80
      %s82 = sshll.u32 [#allocation10], 4
      %s83 = int_to_ptr.vmem [resolvable:$true] %s82
      %88 = dma.hbm_to_vmem [thread:$0]  %s81, 512, %s83, [#allocation9], 128, 128, 8
    $region33: #{tpu_custom_call.1} parent=1 // pred_fallthru
      _
    // Predicated region
    $region34: #{tpu_custom_call.1} parent=1 // pred_check
      _
    $region35: #{tpu_custom_call.1} parent=1 // pred_check_branch
      %90 = sbr.rel (0) target = $region37
    $region36: #{tpu_custom_call.1} parent=1 // pred_region
      _
    $region37: #{tpu_custom_call.1} parent=1 // pred_fallthru
      _
    // Predicated region
    $region38: #{tpu_custom_call.1} parent=1 // pred_check
      _
    $region39: #{tpu_custom_call.1} parent=1 // pred_check_branch
      %92 = sbr.rel (0) target = $region41
    $region40: #{tpu_custom_call.1} parent=1 // pred_region
      %94 = dma.done [#allocation3], 256
    $region41: #{tpu_custom_call.1} parent=1 // pred_fallthru
      _
    // Predicated region
    $region42: #{tpu_custom_call.1} parent=1 // pred_check
      _
    $region43: #{tpu_custom_call.1} parent=1 // pred_check_branch
      %96 = sbr.rel (0) target = $region45
    $region44: #{tpu_custom_call.1} parent=1 // pred_region
      %98 = dma.done [#allocation6], 512
    $region45: #{tpu_custom_call.1} parent=1 // pred_fallthru
      _
    // Predicated region
    $region46: #{tpu_custom_call.1} parent=1 // pred_check
      _
    $region47: #{tpu_custom_call.1} parent=1 // pred_check_branch
      %100 = sbr.rel (0) target = $region49
    $region48: #{tpu_custom_call.1} parent=1 // pred_region
      %102 = dma.done [#allocation6], 512
    $region49: #{tpu_custom_call.1} parent=1 // pred_fallthru
      _
    // Predicated region
    $region50: #{tpu_custom_call.1} parent=1 // pred_check
      _
    $region51: #{tpu_custom_call.1} parent=1 // pred_check_branch
      %104 = sbr.rel (0) target = $region53
    $region52: #{tpu_custom_call.1} parent=1 // pred_region
      %106 = dma.done [#allocation9], 512
    $region53: #{tpu_custom_call.1} parent=1 // pred_fallthru
      _
    // Predicated region
    $region54: #{tpu_custom_call.1} parent=1 // pred_check
      _
    $region55: #{tpu_custom_call.1} parent=1 // pred_check_branch
      %108 = sbr.rel (0) target = $region57
    $region56: #{tpu_custom_call.1} parent=1 // pred_region
      %110 = dma.done [#allocation9], 512
    $region57: #{tpu_custom_call.1} parent=1 // pred_fallthru
      _
    %v111 = vld [vmem:[#allocation2] sm:$0xff]
    %v112 = vld [vmem:[#allocation2 + $0x8] sm:$0xff]
    %v113 = vld [vmem:[#allocation5] sm:$0xff]
    %v114 = vld [vmem:[#allocation5 + $0x8] sm:$0xff]
    %v115 = vld [vmem:[#allocation5 + $0x10] sm:$0xff]
    %v116 = vld [vmem:[#allocation5 + $0x18] sm:$0xff]
    %v117 = vld [vmem:[%s2] sm:$0x1]
    %v119 = vperm.slane %v117, 0
    %vm121 = vcmask 261120
    %v123 = vsel %vm121, %v111, 0
    %v126 = vsel %vm121, %v112, 0
    %128 = vmatpush.msra.mxu0 0.0
    %129 = vmatpush.msra.mxu0 0.0
    %130 = vmatpush.msra.mxu0 0.0
    %131 = vmatpush.msra.mxu0 0.0
    %132 = vmatpush.msra.mxu0 0.0
    %133 = vmatpush.msra.mxu0 0.0
    %134 = vmatpush.msra.mxu0 0.0
    %135 = vmatpush.msra.mxu0 0.0
    %136 = vmatpush.msra.mxu0 0.0
    %137 = vmatpush.msra.mxu0 0.0
    %138 = vmatpush.msra.mxu0 0.0
    %139 = vmatpush.msra.mxu0 0.0
    %140 = vmatpush.msra.mxu0 %v116
    %141 = vmatpush.msra.mxu0 %v115
    %142 = vmatpush.msra.mxu0 %v114
    %143 = vmatpush.msra.mxu0 %v113
    %144 = vmatmul.f32.gmra.mxu0 %v123
    %v145 = vpop.f32.mrf.mxu0
    %v146 = vadd.f32 %v119, %v145
    %147 = vmatmul.f32.gmra.mxu0 %v126
    %v148 = vpop.f32.mrf.mxu0
    %v149 = vadd.f32 %v119, %v148
    %150 = vdwg.mxu0
    %v151 = vld [vmem:[#allocation7] sm:$0xff]
    %v152 = vld [vmem:[#allocation7 + $0x8] sm:$0xff]
    %v153 = vld [vmem:[#allocation7 + $0x10] sm:$0xff]
    %v154 = vld [vmem:[#allocation7 + $0x18] sm:$0xff]
    %v155 = vld [vmem:[%s4] sm:$0x1]
    %v157 = vperm.slane %v155, 0
    %159 = vmatpush.msra.mxu0 0.0
    %160 = vmatpush.msra.mxu0 0.0
    %161 = vmatpush.msra.mxu0 0.0
    %162 = vmatpush.msra.mxu0 0.0
    %163 = vmatpush.msra.mxu0 0.0
    %164 = vmatpush.msra.mxu0 0.0
    %165 = vmatpush.msra.mxu0 0.0
    %166 = vmatpush.msra.mxu0 0.0
    %167 = vmatpush.msra.mxu0 0.0
    %168 = vmatpush.msra.mxu0 0.0
    %169 = vmatpush.msra.mxu0 0.0
    %170 = vmatpush.msra.mxu0 0.0
    %171 = vmatpush.msra.mxu0 %v154
    %172 = vmatpush.msra.mxu0 %v153
    %173 = vmatpush.msra.mxu0 %v152
    %174 = vmatpush.msra.mxu0 %v151
    %175 = vmatmul.f32.gmra.mxu0 %v123
    %v176 = vpop.f32.mrf.mxu0
    %v177 = vadd.f32 %v157, %v176
    %178 = vmatmul.f32.gmra.mxu0 %v126
    %v179 = vpop.f32.mrf.mxu0
    %v180 = vadd.f32 %v157, %v179
    %181 = vdwg.mxu0
    %v182 = vld [vmem:[#allocation8] sm:$0xff]
    %v183 = vld [vmem:[#allocation8 + $0x8] sm:$0xff]
    %v184 = vld [vmem:[#allocation8 + $0x10] sm:$0xff]
    %v185 = vld [vmem:[#allocation8 + $0x18] sm:$0xff]
    %v186 = vld [vmem:[%s6] sm:$0x1]
    %v188 = vperm.slane %v186, 0
    %190 = vmatpush.msra.mxu0 0.0
    %191 = vmatpush.msra.mxu0 0.0
    %192 = vmatpush.msra.mxu0 0.0
    %193 = vmatpush.msra.mxu0 0.0
    %194 = vmatpush.msra.mxu0 0.0
    %195 = vmatpush.msra.mxu0 0.0
    %196 = vmatpush.msra.mxu0 0.0
    %197 = vmatpush.msra.mxu0 0.0
    %198 = vmatpush.msra.mxu0 0.0
    %199 = vmatpush.msra.mxu0 0.0
    %200 = vmatpush.msra.mxu0 0.0
    %201 = vmatpush.msra.mxu0 0.0
    %202 = vmatpush.msra.mxu0 %v185
    %203 = vmatpush.msra.mxu0 %v184
    %204 = vmatpush.msra.mxu0 %v183
    %205 = vmatpush.msra.mxu0 %v182
    %206 = vmatmul.f32.gmra.mxu0 %v123
    %v207 = vpop.f32.mrf.mxu0
    %v208 = vadd.f32 %v188, %v207
    %209 = vmatmul.f32.gmra.mxu0 %v126
    %v210 = vpop.f32.mrf.mxu0
    %v211 = vadd.f32 %v188, %v210
    %212 = vdwg.mxu0
    %v213 = vld [vmem:[%s8] sm:$0x1]
    %vm214 = vcmask 64512
    %v216 = vsel %vm214, %v146, 0
    %v219 = vsel %vm214, %v177, 0
    %221 = vmatpush.xpose.msra.mxu0 0.0
    %222 = vmatpush.xpose.msra.mxu0 0.0
    %223 = vmatpush.xpose.msra.mxu0 0.0
    %224 = vmatpush.xpose.msra.mxu0 0.0
    %225 = vmatpush.xpose.msra.mxu0 0.0
    %226 = vmatpush.xpose.msra.mxu0 0.0
    %227 = vmatpush.xpose.msra.mxu0 0.0
    %228 = vmatpush.xpose.msra.mxu0 0.0
    %229 = vmatpush.xpose.msra.mxu0 0.0
    %230 = vmatpush.xpose.msra.mxu0 0.0
    %231 = vmatpush.xpose.msra.mxu0 0.0
    %232 = vmatpush.xpose.msra.mxu0 0.0
    %233 = vmatpush.xpose.msra.mxu0 0.0
    %234 = vmatpush.xpose.msra.mxu0 0.0
    %235 = vmatpush.xpose.msra.mxu0 0.0
    %236 = vmatpush.xpose.msra.mxu0 %v219
    %237 = vmatmul.f32.gmra.mxu0 %v216
    %v238 = vpop.f32.mrf.mxu0
    %v239 = vadd.f32 0.0, %v238
    %240 = vdwg.mxu0
    %v241 = vsel %vm214, %v239, -inf
    %242 = vmax.xlane.f32.xlu0 %v241
    %v243 = vpop.xlane.xlu0 %242
    %v244 = vsub.f32 %v239, %v243
    %v245 = vmul.f32 %v244, 1.442695
    %v246 = vpow.pop %v245
    %v247 = vsel %vm214, %v246, 0.0
    %248 = vadd.xlane.f32.xlu0 %v247
    %v249 = vpop.xlane.xlu0 %248
    %v251 = vsel %vm214, %v246, 0
    %253 = vmatpush.msra.mxu0 0.0
    %254 = vmatpush.msra.mxu0 0.0
    %255 = vmatpush.msra.mxu0 0.0
    %256 = vmatpush.msra.mxu0 0.0
    %257 = vmatpush.msra.mxu0 0.0
    %258 = vmatpush.msra.mxu0 0.0
    %259 = vmatpush.msra.mxu0 0.0
    %260 = vmatpush.msra.mxu0 0.0
    %261 = vmatpush.msra.mxu0 0.0
    %262 = vmatpush.msra.mxu0 0.0
    %263 = vmatpush.msra.mxu0 0.0
    %264 = vmatpush.msra.mxu0 0.0
    %265 = vmatpush.msra.mxu0 0.0
    %266 = vmatpush.msra.mxu0 0.0
    %267 = vmatpush.msra.mxu0 0.0
    %268 = vmatpush.msra.mxu0 %v208
    %269 = vmatmul.f32.gmra.mxu0 %v251
    %v270 = vpop.f32.mrf.mxu0
    %v271 = vadd.f32 0.0, %v270
    %272 = vdwg.mxu0
    %v273 = vrcp.pop %v249
    %v274 = vmul.f32 %v249, %v273
    %v275 = vsub.f32 1.0, %v274
    %v276 = vmul.f32 %v273, %v275
    %v277 = vadd.f32 %v273, %v276
    %vm278 = vweird.f32 %v249
    %vm279 = vweird.f32 %v273
    %vm280 = vmor %vm278, %vm279
    %v281 = vsel %vm280, %v273, %v277
    %v282 = vand.u32 2147483647, %v249
    %vm283 = vcmp.eq.f32.partialorder %v282, 8.507059e+37
    %v284 = vand.u32 %v249, 2147483648
    %v285 = vor.u32 1.1754944e-38, %v284
    %v286 = vsel %vm283, %v285, %v281
    %v287 = vmul.f32 1.0, %v286
    %v288 = vmul.f32 %v271, %v287
    %v289 = vld [vmem:[#allocation10] sm:$0xff]
    %290 = vrot.lane.b32.xlu0 %v146, 120
    %v291 = vpop.permute.xlu0 %290
    %292 = vrot.lane.b32.xlu0 %v177, 120
    %v293 = vpop.permute.xlu0 %292
    %v294 = vsel %vm214, %v291, 0
    %v296 = vsel %vm214, %v293, 0
    %298 = vmatpush.xpose.msra.mxu0 0.0
    %299 = vmatpush.xpose.msra.mxu0 0.0
    %300 = vmatpush.xpose.msra.mxu0 0.0
    %301 = vmatpush.xpose.msra.mxu0 0.0
    %302 = vmatpush.xpose.msra.mxu0 0.0
    %303 = vmatpush.xpose.msra.mxu0 0.0
    %304 = vmatpush.xpose.msra.mxu0 0.0
    %305 = vmatpush.xpose.msra.mxu0 0.0
    %306 = vmatpush.xpose.msra.mxu0 0.0
    %307 = vmatpush.xpose.msra.mxu0 0.0
    %308 = vmatpush.xpose.msra.mxu0 0.0
    %309 = vmatpush.xpose.msra.mxu0 0.0
    %310 = vmatpush.xpose.msra.mxu0 0.0
    %311 = vmatpush.xpose.msra.mxu0 0.0
    %312 = vmatpush.xpose.msra.mxu0 0.0
    %313 = vmatpush.xpose.msra.mxu0 %v296
    %314 = vmatmul.f32.gmra.mxu0 %v294
    %v315 = vpop.f32.mrf.mxu0
    %v316 = vadd.f32 0.0, %v315
    %317 = vdwg.mxu0
    %v318 = vsel %vm214, %v316, -inf
    %319 = vmax.xlane.f32.xlu0 %v318
    %v320 = vpop.xlane.xlu0 %319
    %v321 = vsub.f32 %v316, %v320
    %v322 = vmul.f32 %v321, 1.442695
    %v323 = vpow.pop %v322
    %v324 = vsel %vm214, %v323, 0.0
    %325 = vadd.xlane.f32.xlu0 %v324
    %v326 = vpop.xlane.xlu0 %325
    %328 = vrot.lane.b32.xlu0 %v208, 120
    %v329 = vpop.permute.xlu0 %328
    %v332 = vsel %vm214, %v323, 0
    %334 = vmatpush.msra.mxu0 0.0
    %335 = vmatpush.msra.mxu0 0.0
    %336 = vmatpush.msra.mxu0 0.0
    %337 = vmatpush.msra.mxu0 0.0
    %338 = vmatpush.msra.mxu0 0.0
    %339 = vmatpush.msra.mxu0 0.0
    %340 = vmatpush.msra.mxu0 0.0
    %341 = vmatpush.msra.mxu0 0.0
    %342 = vmatpush.msra.mxu0 0.0
    %343 = vmatpush.msra.mxu0 0.0
    %344 = vmatpush.msra.mxu0 0.0
    %345 = vmatpush.msra.mxu0 0.0
    %346 = vmatpush.msra.mxu0 0.0
    %347 = vmatpush.msra.mxu0 0.0
    %348 = vmatpush.msra.mxu0 0.0
    %349 = vmatpush.msra.mxu0 %v329
    %350 = vmatmul.f32.gmra.mxu0 %v332
    %v351 = vpop.f32.mrf.mxu0
    %v352 = vadd.f32 0.0, %v351
    %353 = vdwg.mxu0
    %v354 = vrcp.pop %v326
    %v355 = vmul.f32 %v326, %v354
    %v356 = vsub.f32 1.0, %v355
    %v357 = vmul.f32 %v354, %v356
    %v358 = vadd.f32 %v354, %v357
    %vm359 = vweird.f32 %v326
    %vm360 = vweird.f32 %v354
    %vm361 = vmor %vm359, %vm360
    %v362 = vsel %vm361, %v354, %v358
    %v363 = vand.u32 2147483647, %v326
    %vm364 = vcmp.eq.f32.partialorder %v363, 8.507059e+37
    %v365 = vand.u32 %v326, 2147483648
    %v366 = vor.u32 1.1754944e-38, %v365
    %v367 = vsel %vm364, %v366, %v362
    %v368 = vmul.f32 1.0, %v367
    %v369 = vmul.f32 %v352, %v368
    %v370 = vld [vmem:[#allocation10 + $0x8] sm:$0xff]
    %v372 = vsel %vm214, %v369, 0
    %374 = vmatpush.msra.mxu0 0.0
    %375 = vmatpush.msra.mxu0 0.0
    %376 = vmatpush.msra.mxu0 0.0
    %377 = vmatpush.msra.mxu0 0.0
    %378 = vmatpush.msra.mxu0 0.0
    %379 = vmatpush.msra.mxu0 0.0
    %380 = vmatpush.msra.mxu0 0.0
    %381 = vmatpush.msra.mxu0 0.0
    %382 = vmatpush.msra.mxu0 0.0
    %383 = vmatpush.msra.mxu0 0.0
    %384 = vmatpush.msra.mxu0 0.0
    %385 = vmatpush.msra.mxu0 0.0
    %386 = vmatpush.msra.mxu0 0.0
    %387 = vmatpush.msra.mxu0 0.0
    %388 = vmatpush.msra.mxu0 0.0
    %389 = vmatpush.msra.mxu0 %v370
    %390 = vmatmul.f32.gmra.mxu0 %v372
    %v391 = vpop.f32.mrf.mxu0
    %v392 = vadd.f32 0.0, %v391
    %393 = vdwg.mxu0
    %v395 = vsel %vm214, %v288, 0
    %397 = vmatpush.msra.mxu0 0.0
    %398 = vmatpush.msra.mxu0 0.0
    %399 = vmatpush.msra.mxu0 0.0
    %400 = vmatpush.msra.mxu0 0.0
    %401 = vmatpush.msra.mxu0 0.0
    %402 = vmatpush.msra.mxu0 0.0
    %403 = vmatpush.msra.mxu0 0.0
    %404 = vmatpush.msra.mxu0 0.0
    %405 = vmatpush.msra.mxu0 0.0
    %406 = vmatpush.msra.mxu0 0.0
    %407 = vmatpush.msra.mxu0 0.0
    %408 = vmatpush.msra.mxu0 0.0
    %409 = vmatpush.msra.mxu0 0.0
    %410 = vmatpush.msra.mxu0 0.0
    %411 = vmatpush.msra.mxu0 0.0
    %412 = vmatpush.msra.mxu0 %v289
    %413 = vmatmul.f32.gmra.mxu0 %v395
    %v414 = vpop.f32.mrf.mxu0
    %v415 = vadd.f32 %v392, %v414
    %416 = vdwg.mxu0
    %417 = vrot.lane.b32.xlu0 %v146, 112
    %v418 = vpop.permute.xlu0 %417
    %419 = vrot.lane.b32.xlu0 %v177, 112
    %v420 = vpop.permute.xlu0 %419
    %v421 = vsel %vm214, %v418, 0
    %v423 = vsel %vm214, %v420, 0
    %425 = vmatpush.xpose.msra.mxu0 0.0
    %426 = vmatpush.xpose.msra.mxu0 0.0
    %427 = vmatpush.xpose.msra.mxu0 0.0
    %428 = vmatpush.xpose.msra.mxu0 0.0
    %429 = vmatpush.xpose.msra.mxu0 0.0
    %430 = vmatpush.xpose.msra.mxu0 0.0
    %431 = vmatpush.xpose.msra.mxu0 0.0
    %432 = vmatpush.xpose.msra.mxu0 0.0
    %433 = vmatpush.xpose.msra.mxu0 0.0
    %434 = vmatpush.xpose.msra.mxu0 0.0
    %435 = vmatpush.xpose.msra.mxu0 0.0
    %436 = vmatpush.xpose.msra.mxu0 0.0
    %437 = vmatpush.xpose.msra.mxu0 0.0
    %438 = vmatpush.xpose.msra.mxu0 0.0
    %439 = vmatpush.xpose.msra.mxu0 0.0
    %440 = vmatpush.xpose.msra.mxu0 %v423
    %441 = vmatmul.f32.gmra.mxu0 %v421
    %v442 = vpop.f32.mrf.mxu0
    %v443 = vadd.f32 0.0, %v442
    %444 = vdwg.mxu0
    %v445 = vsel %vm214, %v443, -inf
    %446 = vmax.xlane.f32.xlu0 %v445
    %v447 = vpop.xlane.xlu0 %446
    %v448 = vsub.f32 %v443, %v447
    %v449 = vmul.f32 %v448, 1.442695
    %v450 = vpow.pop %v449
    %v451 = vsel %vm214, %v450, 0.0
    %452 = vadd.xlane.f32.xlu0 %v451
    %v453 = vpop.xlane.xlu0 %452
    %454 = vrot.lane.b32.xlu0 %v208, 112
    %v455 = vpop.permute.xlu0 %454
    %v458 = vsel %vm214, %v450, 0
    %460 = vmatpush.msra.mxu0 0.0
    %461 = vmatpush.msra.mxu0 0.0
    %462 = vmatpush.msra.mxu0 0.0
    %463 = vmatpush.msra.mxu0 0.0
    %464 = vmatpush.msra.mxu0 0.0
    %465 = vmatpush.msra.mxu0 0.0
    %466 = vmatpush.msra.mxu0 0.0
    %467 = vmatpush.msra.mxu0 0.0
    %468 = vmatpush.msra.mxu0 0.0
    %469 = vmatpush.msra.mxu0 0.0
    %470 = vmatpush.msra.mxu0 0.0
    %471 = vmatpush.msra.mxu0 0.0
    %472 = vmatpush.msra.mxu0 0.0
    %473 = vmatpush.msra.mxu0 0.0
    %474 = vmatpush.msra.mxu0 0.0
    %475 = vmatpush.msra.mxu0 %v455
    %476 = vmatmul.f32.gmra.mxu0 %v458
    %v477 = vpop.f32.mrf.mxu0
    %v478 = vadd.f32 0.0, %v477
    %479 = vdwg.mxu0
    %v480 = vrcp.pop %v453
    %v481 = vmul.f32 %v453, %v480
    %v482 = vsub.f32 1.0, %v481
    %v483 = vmul.f32 %v480, %v482
    %v484 = vadd.f32 %v480, %v483
    %vm485 = vweird.f32 %v453
    %vm486 = vweird.f32 %v480
    %vm487 = vmor %vm485, %vm486
    %v488 = vsel %vm487, %v480, %v484
    %v489 = vand.u32 2147483647, %v453
    %vm490 = vcmp.eq.f32.partialorder %v489, 8.507059e+37
    %v491 = vand.u32 %v453, 2147483648
    %v492 = vor.u32 1.1754944e-38, %v491
    %v493 = vsel %vm490, %v492, %v488
    %v494 = vmul.f32 1.0, %v493
    %v495 = vmul.f32 %v478, %v494
    %v496 = vld [vmem:[#allocation10 + $0x10] sm:$0xff]
    %v498 = vsel %vm214, %v495, 0
    %500 = vmatpush.msra.mxu0 0.0
    %501 = vmatpush.msra.mxu0 0.0
    %502 = vmatpush.msra.mxu0 0.0
    %503 = vmatpush.msra.mxu0 0.0
    %504 = vmatpush.msra.mxu0 0.0
    %505 = vmatpush.msra.mxu0 0.0
    %506 = vmatpush.msra.mxu0 0.0
    %507 = vmatpush.msra.mxu0 0.0
    %508 = vmatpush.msra.mxu0 0.0
    %509 = vmatpush.msra.mxu0 0.0
    %510 = vmatpush.msra.mxu0 0.0
    %511 = vmatpush.msra.mxu0 0.0
    %512 = vmatpush.msra.mxu0 0.0
    %513 = vmatpush.msra.mxu0 0.0
    %514 = vmatpush.msra.mxu0 0.0
    %515 = vmatpush.msra.mxu0 %v496
    %516 = vmatmul.f32.gmra.mxu0 %v498
    %v517 = vpop.f32.mrf.mxu0
    %v518 = vadd.f32 0.0, %v517
    %519 = vdwg.mxu0
    %v520 = vadd.f32 %v415, %v518
    %521 = vrot.lane.b32.xlu0 %v146, 104
    %v522 = vpop.permute.xlu0 %521
    %523 = vrot.lane.b32.xlu0 %v177, 104
    %v524 = vpop.permute.xlu0 %523
    %v525 = vsel %vm214, %v522, 0
    %v527 = vsel %vm214, %v524, 0
    %529 = vmatpush.xpose.msra.mxu0 0.0
    %530 = vmatpush.xpose.msra.mxu0 0.0
    %531 = vmatpush.xpose.msra.mxu0 0.0
    %532 = vmatpush.xpose.msra.mxu0 0.0
    %533 = vmatpush.xpose.msra.mxu0 0.0
    %534 = vmatpush.xpose.msra.mxu0 0.0
    %535 = vmatpush.xpose.msra.mxu0 0.0
    %536 = vmatpush.xpose.msra.mxu0 0.0
    %537 = vmatpush.xpose.msra.mxu0 0.0
    %538 = vmatpush.xpose.msra.mxu0 0.0
    %539 = vmatpush.xpose.msra.mxu0 0.0
    %540 = vmatpush.xpose.msra.mxu0 0.0
    %541 = vmatpush.xpose.msra.mxu0 0.0
    %542 = vmatpush.xpose.msra.mxu0 0.0
    %543 = vmatpush.xpose.msra.mxu0 0.0
    %544 = vmatpush.xpose.msra.mxu0 %v527
    %545 = vmatmul.f32.gmra.mxu0 %v525
    %v546 = vpop.f32.mrf.mxu0
    %v547 = vadd.f32 0.0, %v546
    %548 = vdwg.mxu0
    %v549 = vsel %vm214, %v547, -inf
    %550 = vmax.xlane.f32.xlu0 %v549
    %v551 = vpop.xlane.xlu0 %550
    %v552 = vsub.f32 %v547, %v551
    %v553 = vmul.f32 %v552, 1.442695
    %v554 = vpow.pop %v553
    %v555 = vsel %vm214, %v554, 0.0
    %556 = vadd.xlane.f32.xlu0 %v555
    %v557 = vpop.xlane.xlu0 %556
    %558 = vrot.lane.b32.xlu0 %v208, 104
    %v559 = vpop.permute.xlu0 %558
    %v562 = vsel %vm214, %v554, 0
    %564 = vmatpush.msra.mxu0 0.0
    %565 = vmatpush.msra.mxu0 0.0
    %566 = vmatpush.msra.mxu0 0.0
    %567 = vmatpush.msra.mxu0 0.0
    %568 = vmatpush.msra.mxu0 0.0
    %569 = vmatpush.msra.mxu0 0.0
    %570 = vmatpush.msra.mxu0 0.0
    %571 = vmatpush.msra.mxu0 0.0
    %572 = vmatpush.msra.mxu0 0.0
    %573 = vmatpush.msra.mxu0 0.0
    %574 = vmatpush.msra.mxu0 0.0
    %575 = vmatpush.msra.mxu0 0.0
    %576 = vmatpush.msra.mxu0 0.0
    %577 = vmatpush.msra.mxu0 0.0
    %578 = vmatpush.msra.mxu0 0.0
    %579 = vmatpush.msra.mxu0 %v559
    %580 = vmatmul.f32.gmra.mxu0 %v562
    %v581 = vpop.f32.mrf.mxu0
    %v582 = vadd.f32 0.0, %v581
    %583 = vdwg.mxu0
    %v584 = vrcp.pop %v557
    %v585 = vmul.f32 %v557, %v584
    %v586 = vsub.f32 1.0, %v585
    %v587 = vmul.f32 %v584, %v586
    %v588 = vadd.f32 %v584, %v587
    %vm589 = vweird.f32 %v557
    %vm590 = vweird.f32 %v584
    %vm591 = vmor %vm589, %vm590
    %v592 = vsel %vm591, %v584, %v588
    %v593 = vand.u32 2147483647, %v557
    %vm594 = vcmp.eq.f32.partialorder %v593, 8.507059e+37
    %v595 = vand.u32 %v557, 2147483648
    %v596 = vor.u32 1.1754944e-38, %v595
    %v597 = vsel %vm594, %v596, %v592
    %v598 = vmul.f32 1.0, %v597
    %v599 = vmul.f32 %v582, %v598
    %v600 = vld [vmem:[#allocation10 + $0x18] sm:$0xff]
    %v602 = vsel %vm214, %v599, 0
    %604 = vmatpush.msra.mxu0 0.0
    %605 = vmatpush.msra.mxu0 0.0
    %606 = vmatpush.msra.mxu0 0.0
    %607 = vmatpush.msra.mxu0 0.0
    %608 = vmatpush.msra.mxu0 0.0
    %609 = vmatpush.msra.mxu0 0.0
    %610 = vmatpush.msra.mxu0 0.0
    %611 = vmatpush.msra.mxu0 0.0
    %612 = vmatpush.msra.mxu0 0.0
    %613 = vmatpush.msra.mxu0 0.0
    %614 = vmatpush.msra.mxu0 0.0
    %615 = vmatpush.msra.mxu0 0.0
    %616 = vmatpush.msra.mxu0 0.0
    %617 = vmatpush.msra.mxu0 0.0
    %618 = vmatpush.msra.mxu0 0.0
    %619 = vmatpush.msra.mxu0 %v600
    %620 = vmatmul.f32.gmra.mxu0 %v602
    %v621 = vpop.f32.mrf.mxu0
    %v622 = vadd.f32 0.0, %v621
    %623 = vdwg.mxu0
    %v624 = vadd.f32 %v520, %v622
    %v626 = vperm.slane %v213, 0
    %v628 = vadd.f32 %v624, %v626
    %629 = vst.msk [vmem:[#allocation11] sm:$0xff] %vm121, %v628
    %v631 = vsel %vm214, %v149, 0
    %v634 = vsel %vm214, %v180, 0
    %636 = vmatpush.xpose.msra.mxu0 0.0
    %637 = vmatpush.xpose.msra.mxu0 0.0
    %638 = vmatpush.xpose.msra.mxu0 0.0
    %639 = vmatpush.xpose.msra.mxu0 0.0
    %640 = vmatpush.xpose.msra.mxu0 0.0
    %641 = vmatpush.xpose.msra.mxu0 0.0
    %642 = vmatpush.xpose.msra.mxu0 0.0
    %643 = vmatpush.xpose.msra.mxu0 0.0
    %644 = vmatpush.xpose.msra.mxu0 0.0
    %645 = vmatpush.xpose.msra.mxu0 0.0
    %646 = vmatpush.xpose.msra.mxu0 0.0
    %647 = vmatpush.xpose.msra.mxu0 0.0
    %648 = vmatpush.xpose.msra.mxu0 0.0
    %649 = vmatpush.xpose.msra.mxu0 0.0
    %650 = vmatpush.xpose.msra.mxu0 0.0
    %651 = vmatpush.xpose.msra.mxu0 %v634
    %652 = vmatmul.f32.gmra.mxu0 %v631
    %v653 = vpop.f32.mrf.mxu0
    %v654 = vadd.f32 0.0, %v653
    %655 = vdwg.mxu0
    %v656 = vsel %vm214, %v654, -inf
    %657 = vmax.xlane.f32.xlu0 %v656
    %v658 = vpop.xlane.xlu0 %657
    %v659 = vsub.f32 %v654, %v658
    %v660 = vmul.f32 %v659, 1.442695
    %v661 = vpow.pop %v660
    %v662 = vsel %vm214, %v661, 0.0
    %663 = vadd.xlane.f32.xlu0 %v662
    %v664 = vpop.xlane.xlu0 %663
    %v666 = vsel %vm214, %v661, 0
    %668 = vmatpush.msra.mxu0 0.0
    %669 = vmatpush.msra.mxu0 0.0
    %670 = vmatpush.msra.mxu0 0.0
    %671 = vmatpush.msra.mxu0 0.0
    %672 = vmatpush.msra.mxu0 0.0
    %673 = vmatpush.msra.mxu0 0.0
    %674 = vmatpush.msra.mxu0 0.0
    %675 = vmatpush.msra.mxu0 0.0
    %676 = vmatpush.msra.mxu0 0.0
    %677 = vmatpush.msra.mxu0 0.0
    %678 = vmatpush.msra.mxu0 0.0
    %679 = vmatpush.msra.mxu0 0.0
    %680 = vmatpush.msra.mxu0 0.0
    %681 = vmatpush.msra.mxu0 0.0
    %682 = vmatpush.msra.mxu0 0.0
    %683 = vmatpush.msra.mxu0 %v211
    %684 = vmatmul.f32.gmra.mxu0 %v666
    %v685 = vpop.f32.mrf.mxu0
    %v686 = vadd.f32 0.0, %v685
    %687 = vdwg.mxu0
    %v688 = vrcp.pop %v664
    %v689 = vmul.f32 %v664, %v688
    %v690 = vsub.f32 1.0, %v689
    %v691 = vmul.f32 %v688, %v690
    %v692 = vadd.f32 %v688, %v691
    %vm693 = vweird.f32 %v664
    %vm694 = vweird.f32 %v688
    %vm695 = vmor %vm693, %vm694
    %v696 = vsel %vm695, %v688, %v692
    %v697 = vand.u32 2147483647, %v664
    %vm698 = vcmp.eq.f32.partialorder %v697, 8.507059e+37
    %v699 = vand.u32 %v664, 2147483648
    %v700 = vor.u32 1.1754944e-38, %v699
    %v701 = vsel %vm698, %v700, %v696
    %v702 = vmul.f32 1.0, %v701
    %v703 = vmul.f32 %v686, %v702
    %v704 = vld [vmem:[#allocation10] sm:$0xff]
    %705 = vrot.lane.b32.xlu0 %v149, 120
    %v706 = vpop.permute.xlu0 %705
    %707 = vrot.lane.b32.xlu0 %v180, 120
    %v708 = vpop.permute.xlu0 %707
    %v709 = vsel %vm214, %v706, 0
    %v711 = vsel %vm214, %v708, 0
    %713 = vmatpush.xpose.msra.mxu0 0.0
    %714 = vmatpush.xpose.msra.mxu0 0.0
    %715 = vmatpush.xpose.msra.mxu0 0.0
    %716 = vmatpush.xpose.msra.mxu0 0.0
    %717 = vmatpush.xpose.msra.mxu0 0.0
    %718 = vmatpush.xpose.msra.mxu0 0.0
    %719 = vmatpush.xpose.msra.mxu0 0.0
    %720 = vmatpush.xpose.msra.mxu0 0.0
    %721 = vmatpush.xpose.msra.mxu0 0.0
    %722 = vmatpush.xpose.msra.mxu0 0.0
    %723 = vmatpush.xpose.msra.mxu0 0.0
    %724 = vmatpush.xpose.msra.mxu0 0.0
    %725 = vmatpush.xpose.msra.mxu0 0.0
    %726 = vmatpush.xpose.msra.mxu0 0.0
    %727 = vmatpush.xpose.msra.mxu0 0.0
    %728 = vmatpush.xpose.msra.mxu0 %v711
    %729 = vmatmul.f32.gmra.mxu0 %v709
    %v730 = vpop.f32.mrf.mxu0
    %v731 = vadd.f32 0.0, %v730
    %732 = vdwg.mxu0
    %v733 = vsel %vm214, %v731, -inf
    %734 = vmax.xlane.f32.xlu0 %v733
    %v735 = vpop.xlane.xlu0 %734
    %v736 = vsub.f32 %v731, %v735
    %v737 = vmul.f32 %v736, 1.442695
    %v738 = vpow.pop %v737
    %v739 = vsel %vm214, %v738, 0.0
    %740 = vadd.xlane.f32.xlu0 %v739
    %v741 = vpop.xlane.xlu0 %740
    %743 = vrot.lane.b32.xlu0 %v211, 120
    %v744 = vpop.permute.xlu0 %743
    %v747 = vsel %vm214, %v738, 0
    %749 = vmatpush.msra.mxu0 0.0
    %750 = vmatpush.msra.mxu0 0.0
    %751 = vmatpush.msra.mxu0 0.0
    %752 = vmatpush.msra.mxu0 0.0
    %753 = vmatpush.msra.mxu0 0.0
    %754 = vmatpush.msra.mxu0 0.0
    %755 = vmatpush.msra.mxu0 0.0
    %756 = vmatpush.msra.mxu0 0.0
    %757 = vmatpush.msra.mxu0 0.0
    %758 = vmatpush.msra.mxu0 0.0
    %759 = vmatpush.msra.mxu0 0.0
    %760 = vmatpush.msra.mxu0 0.0
    %761 = vmatpush.msra.mxu0 0.0
    %762 = vmatpush.msra.mxu0 0.0
    %763 = vmatpush.msra.mxu0 0.0
    %764 = vmatpush.msra.mxu0 %v744
    %765 = vmatmul.f32.gmra.mxu0 %v747
    %v766 = vpop.f32.mrf.mxu0
    %v767 = vadd.f32 0.0, %v766
    %768 = vdwg.mxu0
    %v769 = vrcp.pop %v741
    %v770 = vmul.f32 %v741, %v769
    %v771 = vsub.f32 1.0, %v770
    %v772 = vmul.f32 %v769, %v771
    %v773 = vadd.f32 %v769, %v772
    %vm774 = vweird.f32 %v741
    %vm775 = vweird.f32 %v769
    %vm776 = vmor %vm774, %vm775
    %v777 = vsel %vm776, %v769, %v773
    %v778 = vand.u32 2147483647, %v741
    %vm779 = vcmp.eq.f32.partialorder %v778, 8.507059e+37
    %v780 = vand.u32 %v741, 2147483648
    %v781 = vor.u32 1.1754944e-38, %v780
    %v782 = vsel %vm779, %v781, %v777
    %v783 = vmul.f32 1.0, %v782
    %v784 = vmul.f32 %v767, %v783
    %v785 = vld [vmem:[#allocation10 + $0x8] sm:$0xff]
    %v787 = vsel %vm214, %v784, 0
    %789 = vmatpush.msra.mxu0 0.0
    %790 = vmatpush.msra.mxu0 0.0
    %791 = vmatpush.msra.mxu0 0.0
    %792 = vmatpush.msra.mxu0 0.0
    %793 = vmatpush.msra.mxu0 0.0
    %794 = vmatpush.msra.mxu0 0.0
    %795 = vmatpush.msra.mxu0 0.0
    %796 = vmatpush.msra.mxu0 0.0
    %797 = vmatpush.msra.mxu0 0.0
    %798 = vmatpush.msra.mxu0 0.0
    %799 = vmatpush.msra.mxu0 0.0
    %800 = vmatpush.msra.mxu0 0.0
    %801 = vmatpush.msra.mxu0 0.0
    %802 = vmatpush.msra.mxu0 0.0
    %803 = vmatpush.msra.mxu0 0.0
    %804 = vmatpush.msra.mxu0 %v785
    %805 = vmatmul.f32.gmra.mxu0 %v787
    %v806 = vpop.f32.mrf.mxu0
    %v807 = vadd.f32 0.0, %v806
    %808 = vdwg.mxu0
    %v810 = vsel %vm214, %v703, 0
    %812 = vmatpush.msra.mxu0 0.0
    %813 = vmatpush.msra.mxu0 0.0
    %814 = vmatpush.msra.mxu0 0.0
    %815 = vmatpush.msra.mxu0 0.0
    %816 = vmatpush.msra.mxu0 0.0
    %817 = vmatpush.msra.mxu0 0.0
    %818 = vmatpush.msra.mxu0 0.0
    %819 = vmatpush.msra.mxu0 0.0
    %820 = vmatpush.msra.mxu0 0.0
    %821 = vmatpush.msra.mxu0 0.0
    %822 = vmatpush.msra.mxu0 0.0
    %823 = vmatpush.msra.mxu0 0.0
    %824 = vmatpush.msra.mxu0 0.0
    %825 = vmatpush.msra.mxu0 0.0
    %826 = vmatpush.msra.mxu0 0.0
    %827 = vmatpush.msra.mxu0 %v704
    %828 = vmatmul.f32.gmra.mxu0 %v810
    %v829 = vpop.f32.mrf.mxu0
    %v830 = vadd.f32 %v807, %v829
    %831 = vdwg.mxu0
    %832 = vrot.lane.b32.xlu0 %v149, 112
    %v833 = vpop.permute.xlu0 %832
    %834 = vrot.lane.b32.xlu0 %v180, 112
    %v835 = vpop.permute.xlu0 %834
    %v836 = vsel %vm214, %v833, 0
    %v838 = vsel %vm214, %v835, 0
    %840 = vmatpush.xpose.msra.mxu0 0.0
    %841 = vmatpush.xpose.msra.mxu0 0.0
    %842 = vmatpush.xpose.msra.mxu0 0.0
    %843 = vmatpush.xpose.msra.mxu0 0.0
    %844 = vmatpush.xpose.msra.mxu0 0.0
    %845 = vmatpush.xpose.msra.mxu0 0.0
    %846 = vmatpush.xpose.msra.mxu0 0.0
    %847 = vmatpush.xpose.msra.mxu0 0.0
    %848 = vmatpush.xpose.msra.mxu0 0.0
    %849 = vmatpush.xpose.msra.mxu0 0.0
    %850 = vmatpush.xpose.msra.mxu0 0.0
    %851 = vmatpush.xpose.msra.mxu0 0.0
    %852 = vmatpush.xpose.msra.mxu0 0.0
    %853 = vmatpush.xpose.msra.mxu0 0.0
    %854 = vmatpush.xpose.msra.mxu0 0.0
    %855 = vmatpush.xpose.msra.mxu0 %v838
    %856 = vmatmul.f32.gmra.mxu0 %v836
    %v857 = vpop.f32.mrf.mxu0
    %v858 = vadd.f32 0.0, %v857
    %859 = vdwg.mxu0
    %v860 = vsel %vm214, %v858, -inf
    %861 = vmax.xlane.f32.xlu0 %v860
    %v862 = vpop.xlane.xlu0 %861
    %v863 = vsub.f32 %v858, %v862
    %v864 = vmul.f32 %v863, 1.442695
    %v865 = vpow.pop %v864
    %v866 = vsel %vm214, %v865, 0.0
    %867 = vadd.xlane.f32.xlu0 %v866
    %v868 = vpop.xlane.xlu0 %867
    %869 = vrot.lane.b32.xlu0 %v211, 112
    %v870 = vpop.permute.xlu0 %869
    %v873 = vsel %vm214, %v865, 0
    %875 = vmatpush.msra.mxu0 0.0
    %876 = vmatpush.msra.mxu0 0.0
    %877 = vmatpush.msra.mxu0 0.0
    %878 = vmatpush.msra.mxu0 0.0
    %879 = vmatpush.msra.mxu0 0.0
    %880 = vmatpush.msra.mxu0 0.0
    %881 = vmatpush.msra.mxu0 0.0
    %882 = vmatpush.msra.mxu0 0.0
    %883 = vmatpush.msra.mxu0 0.0
    %884 = vmatpush.msra.mxu0 0.0
    %885 = vmatpush.msra.mxu0 0.0
    %886 = vmatpush.msra.mxu0 0.0
    %887 = vmatpush.msra.mxu0 0.0
    %888 = vmatpush.msra.mxu0 0.0
    %889 = vmatpush.msra.mxu0 0.0
    %890 = vmatpush.msra.mxu0 %v870
    %891 = vmatmul.f32.gmra.mxu0 %v873
    %v892 = vpop.f32.mrf.mxu0
    %v893 = vadd.f32 0.0, %v892
    %894 = vdwg.mxu0
    %v895 = vrcp.pop %v868
    %v896 = vmul.f32 %v868, %v895
    %v897 = vsub.f32 1.0, %v896
    %v898 = vmul.f32 %v895, %v897
    %v899 = vadd.f32 %v895, %v898
    %vm900 = vweird.f32 %v868
    %vm901 = vweird.f32 %v895
    %vm902 = vmor %vm900, %vm901
    %v903 = vsel %vm902, %v895, %v899
    %v904 = vand.u32 2147483647, %v868
    %vm905 = vcmp.eq.f32.partialorder %v904, 8.507059e+37
    %v906 = vand.u32 %v868, 2147483648
    %v907 = vor.u32 1.1754944e-38, %v906
    %v908 = vsel %vm905, %v907, %v903
    %v909 = vmul.f32 1.0, %v908
    %v910 = vmul.f32 %v893, %v909
    %v911 = vld [vmem:[#allocation10 + $0x10] sm:$0xff]
    %v913 = vsel %vm214, %v910, 0
    %915 = vmatpush.msra.mxu0 0.0
    %916 = vmatpush.msra.mxu0 0.0
    %917 = vmatpush.msra.mxu0 0.0
    %918 = vmatpush.msra.mxu0 0.0
    %919 = vmatpush.msra.mxu0 0.0
    %920 = vmatpush.msra.mxu0 0.0
    %921 = vmatpush.msra.mxu0 0.0
    %922 = vmatpush.msra.mxu0 0.0
    %923 = vmatpush.msra.mxu0 0.0
    %924 = vmatpush.msra.mxu0 0.0
    %925 = vmatpush.msra.mxu0 0.0
    %926 = vmatpush.msra.mxu0 0.0
    %927 = vmatpush.msra.mxu0 0.0
    %928 = vmatpush.msra.mxu0 0.0
    %929 = vmatpush.msra.mxu0 0.0
    %930 = vmatpush.msra.mxu0 %v911
    %931 = vmatmul.f32.gmra.mxu0 %v913
    %v932 = vpop.f32.mrf.mxu0
    %v933 = vadd.f32 0.0, %v932
    %934 = vdwg.mxu0
    %v935 = vadd.f32 %v830, %v933
    %936 = vrot.lane.b32.xlu0 %v149, 104
    %v937 = vpop.permute.xlu0 %936
    %938 = vrot.lane.b32.xlu0 %v180, 104
    %v939 = vpop.permute.xlu0 %938
    %v940 = vsel %vm214, %v937, 0
    %v942 = vsel %vm214, %v939, 0
    %944 = vmatpush.xpose.msra.mxu0 0.0
    %945 = vmatpush.xpose.msra.mxu0 0.0
    %946 = vmatpush.xpose.msra.mxu0 0.0
    %947 = vmatpush.xpose.msra.mxu0 0.0
    %948 = vmatpush.xpose.msra.mxu0 0.0
    %949 = vmatpush.xpose.msra.mxu0 0.0
    %950 = vmatpush.xpose.msra.mxu0 0.0
    %951 = vmatpush.xpose.msra.mxu0 0.0
    %952 = vmatpush.xpose.msra.mxu0 0.0
    %953 = vmatpush.xpose.msra.mxu0 0.0
    %954 = vmatpush.xpose.msra.mxu0 0.0
    %955 = vmatpush.xpose.msra.mxu0 0.0
    %956 = vmatpush.xpose.msra.mxu0 0.0
    %957 = vmatpush.xpose.msra.mxu0 0.0
    %958 = vmatpush.xpose.msra.mxu0 0.0
    %959 = vmatpush.xpose.msra.mxu0 %v942
    %960 = vmatmul.f32.gmra.mxu0 %v940
    %v961 = vpop.f32.mrf.mxu0
    %v962 = vadd.f32 0.0, %v961
    %963 = vdwg.mxu0
    %v964 = vsel %vm214, %v962, -inf
    %965 = vmax.xlane.f32.xlu0 %v964
    %v966 = vpop.xlane.xlu0 %965
    %v967 = vsub.f32 %v962, %v966
    %v968 = vmul.f32 %v967, 1.442695
    %v969 = vpow.pop %v968
    %v970 = vsel %vm214, %v969, 0.0
    %971 = vadd.xlane.f32.xlu0 %v970
    %v972 = vpop.xlane.xlu0 %971
    %973 = vrot.lane.b32.xlu0 %v211, 104
    %v974 = vpop.permute.xlu0 %973
    %v977 = vsel %vm214, %v969, 0
    %979 = vmatpush.msra.mxu0 0.0
    %980 = vmatpush.msra.mxu0 0.0
    %981 = vmatpush.msra.mxu0 0.0
    %982 = vmatpush.msra.mxu0 0.0
    %983 = vmatpush.msra.mxu0 0.0
    %984 = vmatpush.msra.mxu0 0.0
    %985 = vmatpush.msra.mxu0 0.0
    %986 = vmatpush.msra.mxu0 0.0
    %987 = vmatpush.msra.mxu0 0.0
    %988 = vmatpush.msra.mxu0 0.0
    %989 = vmatpush.msra.mxu0 0.0
    %990 = vmatpush.msra.mxu0 0.0
    %991 = vmatpush.msra.mxu0 0.0
    %992 = vmatpush.msra.mxu0 0.0
    %993 = vmatpush.msra.mxu0 0.0
    %994 = vmatpush.msra.mxu0 %v974
    %995 = vmatmul.f32.gmra.mxu0 %v977
    %v996 = vpop.f32.mrf.mxu0
    %v997 = vadd.f32 0.0, %v996
    %998 = vdwg.mxu0
    %v999 = vrcp.pop %v972
    %v1000 = vmul.f32 %v972, %v999
    %v1001 = vsub.f32 1.0, %v1000
    %v1002 = vmul.f32 %v999, %v1001
    %v1003 = vadd.f32 %v999, %v1002
    %vm1004 = vweird.f32 %v972
    %vm1005 = vweird.f32 %v999
    %vm1006 = vmor %vm1004, %vm1005
    %v1007 = vsel %vm1006, %v999, %v1003
    %v1008 = vand.u32 2147483647, %v972
    %vm1009 = vcmp.eq.f32.partialorder %v1008, 8.507059e+37
    %v1010 = vand.u32 %v972, 2147483648
    %v1011 = vor.u32 1.1754944e-38, %v1010
    %v1012 = vsel %vm1009, %v1011, %v1007
    %v1013 = vmul.f32 1.0, %v1012
    %v1014 = vmul.f32 %v997, %v1013
    %v1015 = vld [vmem:[#allocation10 + $0x18] sm:$0xff]
    %v1017 = vsel %vm214, %v1014, 0
    %1019 = vmatpush.msra.mxu0 0.0
    %1020 = vmatpush.msra.mxu0 0.0
    %1021 = vmatpush.msra.mxu0 0.0
    %1022 = vmatpush.msra.mxu0 0.0
    %1023 = vmatpush.msra.mxu0 0.0
    %1024 = vmatpush.msra.mxu0 0.0
    %1025 = vmatpush.msra.mxu0 0.0
    %1026 = vmatpush.msra.mxu0 0.0
    %1027 = vmatpush.msra.mxu0 0.0
    %1028 = vmatpush.msra.mxu0 0.0
    %1029 = vmatpush.msra.mxu0 0.0
    %1030 = vmatpush.msra.mxu0 0.0
    %1031 = vmatpush.msra.mxu0 0.0
    %1032 = vmatpush.msra.mxu0 0.0
    %1033 = vmatpush.msra.mxu0 0.0
    %1034 = vmatpush.msra.mxu0 %v1015
    %1035 = vmatmul.f32.gmra.mxu0 %v1017
    %v1036 = vpop.f32.mrf.mxu0
    %v1037 = vadd.f32 0.0, %v1036
    %1038 = vdwg.mxu0
    %v1039 = vadd.f32 %v935, %v1037
    %v1040 = vadd.f32 %v1039, %v626
    %s1041 = scalar_lea.vmem [#allocation11], 8
    %1042 = vst.msk [vmem:[%s1041] sm:$0xff] %vm121, %v1040
    // Predicated region
    $region58: #{tpu_custom_call.1} parent=1 // pred_check
      _
    $region59: #{tpu_custom_call.1} parent=1 // pred_check_branch
      %1044 = sbr.rel (0) target = $region61
    $region60: #{tpu_custom_call.1} parent=1 // pred_region
      %1046 = vsyncadd [#allocation4], 0
      %s1047 = sshll.u32 [#allocation11], 4
      %s1048 = int_to_ptr.vmem [resolvable:$true] %s1047
      %s1049 = sshll.u32 %s9, 4
      %s1050 = int_to_ptr.hbm [resolvable:$true] %s1049
      %1055 = dma.vmem_to_hbm [thread:$0]  %s1048, 256, %s1050, [#allocation4], 128, 128, 8
    $region61: #{tpu_custom_call.1} parent=1 // pred_fallthru
      _
    // Predicated region
    $region62: #{tpu_custom_call.1} parent=1 // pred_check
      _
    $region63: #{tpu_custom_call.1} parent=1 // pred_check_branch
      %1057 = sbr.rel (0) target = $region65
    $region64: #{tpu_custom_call.1} parent=1 // pred_region
      %1059 = dma.done [#allocation4], 256
    $region65: #{tpu_custom_call.1} parent=1 // pred_fallthru
      _
    %1060 = vsyncpa [#allocation3], 1
    %1061 = vsyncpa [#allocation6], 1
    %1062 = vsyncpa [#allocation9], 1
    %1063 = vsyncpa [#allocation4], 1

</llo_original>
